<compile_context>
chip_gen: v5e
topology: v5e:2x2
jax: 0.10.0
libtpu: 0.0.40
codegen_flags: <defaults>
</compile_context>

<pallas_src>
import jax
import jax.numpy as jnp
import numpy as np
from jax import lax
from jax.experimental import pallas as pl
from jax.experimental.pallas import tpu as pltpu


def _conv_stats_kernel(x_ref, w_ref, b_ref, o_ref, ssum_ref, ssq_ref, pad_ref):
    # x_ref:   (1, F, H, W, Cin)   unpadded input frames (channels-last)
    # w_ref:   (9*Cin, Cout)       conv weights pre-reshaped for im2col
    # b_ref:   (1, Cout)           conv bias
    # o_ref:   (1, F, H, W*Cout)   lane-dense conv output
    # ssum_ref/ssq_ref: (1, 1, 1, Cout) partial GroupNorm statistics
    # pad_ref: VMEM scratch (F, H+2, W+2, Cin) for in-kernel zero padding
    _, F, H, W, Cin = x_ref.shape
    Cout = b_ref.shape[-1]

    # (0,1,1) spatial padding done in VMEM — avoids a padded HBM copy upstream.
    pad_ref[...] = jnp.zeros_like(pad_ref)
    pad_ref[:, 1:H + 1, 1:W + 1, :] = x_ref[0].astype(pad_ref.dtype)
    xp = pad_ref[...]

    # im2col: concatenate the 9 shifted taps once into a (F*H*W, 9*Cin) patch
    # and issue a single MXU matmul with K = 9*Cin (instead of 9 K=Cin dots).
    taps = [xp[:, kh:kh + H, kw:kw + W, :]
            for kh in range(3) for kw in range(3)]
    patch = jnp.concatenate(taps, axis=-1).reshape(F * H * W, 9 * Cin)
    acc = jnp.dot(patch, w_ref[...], preferred_element_type=jnp.float32)
    acc = acc + b_ref[...]                       # (F*H*W, Cout), f32

    # Fused GroupNorm-statistics epilogue: per-channel partial sums for this
    # block, so the second pass never re-reads/re-reduces the conv output.
    ssum_ref[0, 0] = jnp.sum(acc, axis=0, keepdims=True)
    ssq_ref[0, 0] = jnp.sum(acc * acc, axis=0, keepdims=True)

    # Lane-dense store: pack (w, cout) into the last dim so the output tile's
    # trailing dim is W*Cout (full-lane vst instead of Cout/128 masked vst.msk).
    # TODO(synk): skip this pack when Cout is already a multiple of 128.
    acc3 = acc.reshape(F * H, W, Cout)
    dense = jnp.concatenate([acc3[:, wi, :] for wi in range(W)], axis=-1)
    o_ref[...] = dense.reshape(1, F, H, W * Cout).astype(o_ref.dtype)


def _affine_silu_kernel(x_ref, a_ref, c_ref, o_ref):
    # x_ref/o_ref: (1, F, H, W*C) lane-dense; a_ref/c_ref: (1, 1, W*C)
    x = x_ref[...].astype(jnp.float32)
    y = x * a_ref[...] + c_ref[...]              # folded GN affine (+scale/shift)
    o_ref[...] = (y * jax.nn.sigmoid(y)).astype(o_ref.dtype)   # SiLU


def _pick_frames_per_step(T, H, W, Cin, Cout, budget_bytes):
    """Largest F dividing T whose per-step conv working set fits the budget.

    Batching frames per grid step makes DMAs big enough to approach the HBM
    roofline and amortises the ~0.35us per-grid-step overhead.
    """
    bytes_per_frame = 4 * (
        H * W * Cin                   # input block
        + (H + 2) * (W + 2) * Cin     # in-kernel padded scratch slab
        + 2 * H * W * Cout)           # f32 accumulator + lane-dense output block
    bytes_per_frame *= 2              # double-buffering headroom
    best = 1
    for f in range(1, T + 1):
        if T % f == 0 and f * bytes_per_frame <= budget_bytes:
            best = f
    return best


def block3d_forward(x, params, scale_shift=None, *, groups=8, eps=1e-5,
                    vmem_budget_bytes=4 * 1024 * 1024):
    """x: (B, Cin, T, H, W) float32 (PyTorch NCTHW-for-3D layout)."""
    w, b = params["w"], params["b"]          # w: (3, 3, Cin, Cout), b: (Cout,)
    gamma, beta = params["gamma"], params["beta"]
    B, Cin, T, H, W = x.shape
    Cout = w.shape[-1]
    assert Cout % groups == 0
    cg = Cout // groups
    WC = W * Cout

    F = _pick_frames_per_step(T, H, W, Cin, Cout, vmem_budget_bytes)
    TB = T // F

    # channels-last view; NO jnp.pad here (padding happens inside the kernel).
    # NOTE: for v6e/v7x production shapes, cast x_tl / w2d to bf16 here
    # (accumulation stays f32 via preferred_element_type); kept f32 so the
    # same code is exact on v5e and matches the f32 reference tolerance.
    x_tl = jnp.transpose(x, (0, 2, 3, 4, 1))            # (B, T, H, W, Cin)
    w2d = w.reshape(9 * Cin, Cout).astype(jnp.float32)
    b2d = b.reshape(1, Cout).astype(jnp.float32)

    cparams = pltpu.CompilerParams(
        dimension_semantics=("parallel", "parallel"),
        vmem_limit_bytes=32 * 1024 * 1024)

    # ---------------- pass 1: conv + fused GroupNorm statistics ----------------
    conv_out, ssum, ssq = pl.pallas_call(
        _conv_stats_kernel,
        out_shape=(
            jax.ShapeDtypeStruct((B, T, H, WC), jnp.float32),
            jax.ShapeDtypeStruct((B, TB, 1, Cout), jnp.float32),
            jax.ShapeDtypeStruct((B, TB, 1, Cout), jnp.float32),
        ),
        grid=(B, TB),
        in_specs=[
            pl.BlockSpec((1, F, H, W, Cin), lambda bi, ti: (bi, ti, 0, 0, 0)),
            pl.BlockSpec((9 * Cin, Cout), lambda bi, ti: (0, 0)),
            pl.BlockSpec((1, Cout), lambda bi, ti: (0, 0)),
        ],
        out_specs=(
            pl.BlockSpec((1, F, H, WC), lambda bi, ti: (bi, ti, 0, 0)),
            pl.BlockSpec((1, 1, 1, Cout), lambda bi, ti: (bi, ti, 0, 0)),
            pl.BlockSpec((1, 1, 1, Cout), lambda bi, ti: (bi, ti, 0, 0)),
        ),
        scratch_shapes=[pltpu.VMEM((F, H + 2, W + 2, Cin), jnp.float32)],
        compiler_params=cparams,
    )(x_tl, w2d, b2d)

    # ------ tiny per-(batch, group) statistics + affine folding (plain JAX) ------
    n = float(T * H * W * cg)
    sum_c = jnp.sum(ssum[:, :, 0, :], axis=1)            # (B, Cout)
    sq_c = jnp.sum(ssq[:, :, 0, :], axis=1)              # (B, Cout)
    sum_g = jnp.sum(sum_c.reshape(B, groups, cg), axis=-1)
    sq_g = jnp.sum(sq_c.reshape(B, groups, cg), axis=-1)
    mean_g = sum_g / n
    var_g = jnp.maximum(sq_g / n - mean_g * mean_g, 0.0)  # clamp: never negative
    inv_g = lax.rsqrt(var_g + eps)
    mean_c = jnp.repeat(mean_g, cg, axis=1)               # (B, Cout)
    inv_c = jnp.repeat(inv_g, cg, axis=1)                 # (B, Cout)

    if scale_shift is not None:
        scale, shift = scale_shift
        scale = scale.reshape(B, Cout).astype(jnp.float32)
        shift = shift.reshape(B, Cout).astype(jnp.float32)
    else:
        scale = jnp.zeros((B, Cout), jnp.float32)
        shift = jnp.zeros((B, Cout), jnp.float32)

    g = gamma.reshape(1, Cout).astype(jnp.float32)
    be = beta.reshape(1, Cout).astype(jnp.float32)
    # y = ((x - mean) * inv * gamma + beta) * (scale + 1) + shift  ==  x * a + c
    a_bc = inv_c * g * (scale + 1.0)                                   # (B, Cout)
    c_bc = (be - mean_c * inv_c * g) * (scale + 1.0) + shift           # (B, Cout)
    # tile per-channel coefficients along W so they line up with the
    # lane-interleaved (w, c) packing of the conv output's last dim
    a_t = jnp.tile(a_bc, (1, W)).reshape(B, 1, WC)
    c_t = jnp.tile(c_bc, (1, W)).reshape(B, 1, WC)

    # ------------- pass 2: normalize (folded affine) + SiLU, lane-dense -------------
    out = pl.pallas_call(
        _affine_silu_kernel,
        out_shape=jax.ShapeDtypeStruct((B, T, H, WC), jnp.float32),
        grid=(B, TB),
        in_specs=[
            pl.BlockSpec((1, F, H, WC), lambda bi, ti: (bi, ti, 0, 0)),
            pl.BlockSpec((1, 1, WC), lambda bi, ti: (bi, 0, 0)),
            pl.BlockSpec((1, 1, WC), lambda bi, ti: (bi, 0, 0)),
        ],
        out_specs=pl.BlockSpec((1, F, H, WC), lambda bi, ti: (bi, ti, 0, 0)),
        compiler_params=cparams,
    )(conv_out, a_t, c_t)

    out = out.reshape(B, T, H, W, Cout)
    return jnp.transpose(out, (0, 4, 1, 2, 3))            # (B, Cout, T, H, W)


def _reference(x, params, scale_shift, groups=8, eps=1e-5):
    """Pure-JAX reference mirroring the PyTorch module semantics."""
    w, b = params["w"], params["b"]
    gamma, beta = params["gamma"], params["beta"]
    Cout = w.shape[-1]
    w_oidhw = jnp.transpose(w, (3, 2, 0, 1))[:, :, None, :, :]     # (Cout,Cin,1,3,3)
    y = lax.conv_general_dilated(
        x, w_oidhw, window_strides=(1, 1, 1),
        padding=((0, 0), (1, 1), (1, 1)),
        dimension_numbers=("NCDHW", "OIDHW", "NCDHW"))
    y = y + b.reshape(1, Cout, 1, 1, 1)
    B, C, T, H, W = y.shape
    yg = y.reshape(B, groups, C // groups, T, H, W)
    mean = jnp.mean(yg, axis=(2, 3, 4, 5), keepdims=True)
    var = jnp.mean((yg - mean) ** 2, axis=(2, 3, 4, 5), keepdims=True)
    yn = ((yg - mean) / jnp.sqrt(var + eps)).reshape(B, C, T, H, W)
    yn = yn * gamma.reshape(1, C, 1, 1, 1) + beta.reshape(1, C, 1, 1, 1)
    if scale_shift is not None:
        scale, shift = scale_shift
        yn = yn * (scale + 1.0) + shift
    return yn * jax.nn.sigmoid(yn)


if __name__ == "__main__":
    B, Cin, Cout, T, H, W, G = 2, 4, 16, 3, 8, 8, 8
    key = jax.random.PRNGKey(0)
    k1, k2, k3, k4, k5 = jax.random.split(key, 5)

    params = {
        "w": jax.random.normal(k1, (3, 3, Cin, Cout), jnp.float32) * 0.1,
        "b": jax.random.normal(k2, (Cout,), jnp.float32) * 0.05,
        "gamma": jnp.ones((Cout,), jnp.float32),   # GroupNorm affine defaults
        "beta": jnp.zeros((Cout,), jnp.float32),
    }
    x = jax.random.normal(k3, (B, Cin, T, H, W), jnp.float32)
    scale = jax.random.normal(k4, (B, Cout, 1, 1, 1), jnp.float32) * 0.1
    shift = jax.random.normal(k5, (B, Cout, 1, 1, 1), jnp.float32) * 0.1

    out = block3d_forward(x, params, (scale, shift), groups=G)
    out = jax.block_until_ready(out)
    assert out.shape == (B, Cout, T, H, W)
    ref = _reference(x, params, (scale, shift), groups=G)
    np.testing.assert_allclose(np.asarray(out), np.asarray(ref),
                               atol=1e-4, rtol=1e-4)

    # also exercise the no-scale_shift path
    out2 = jax.block_until_ready(block3d_forward(x, params, None, groups=G))
    ref2 = _reference(x, params, None, groups=G)
    np.testing.assert_allclose(np.asarray(out2), np.asarray(ref2),
                               atol=1e-4, rtol=1e-4)

    print("KERNEL_OK")
</pallas_src>

<mosaic_0001>
module attributes {stable_mosaic.version = 11 : i64} {
  func.func @_conv_stats_kernel(%arg0: i32, %arg1: i32, %arg2: memref<1x3x8x8x4xf32, #tpu.memory_space<vmem>>, %arg3: memref<36x16xf32, #tpu.memory_space<vmem>>, %arg4: memref<1x16xf32, #tpu.memory_space<vmem>>, %arg5: memref<1x3x8x128xf32, #tpu.memory_space<vmem>>, %arg6: memref<1x1x1x16xf32, #tpu.memory_space<vmem>>, %arg7: memref<1x1x1x16xf32, #tpu.memory_space<vmem>>, %arg8: memref<3x10x10x4xf32, #tpu.memory_space<vmem>>) attributes {dimension_semantics = [#tpu.dimension_semantics<parallel>, #tpu.dimension_semantics<parallel>], iteration_bounds = array<i64: 2, 1>, scalar_prefetch = 0 : i64, scratch_operands = 1 : i64, tpu.core_type = #tpu.core_type<tc>, window_params = [{transform_indices = @transform_0, window_bounds = array<i64: 1, 3, 8, 8, 4>}, {pipeline_mode = #tpu.pipeline_mode<synchronous>, transform_indices = @transform_1, window_bounds = array<i64: 36, 16>}, {pipeline_mode = #tpu.pipeline_mode<synchronous>, transform_indices = @transform_2, window_bounds = array<i64: 1, 16>}, {transform_indices = @transform_3, window_bounds = array<i64: 1, 3, 8, 128>}, {transform_indices = @transform_4, window_bounds = array<i64: 1, 1, 1, 16>}, {transform_indices = @transform_5, window_bounds = array<i64: 1, 1, 1, 16>}]} {
    %cst = arith.constant 0.000000e+00 : f32
    %0 = vector.broadcast %cst : f32 to vector<3x10x10x4xf32>
    %c0 = arith.constant 0 : index
    %c0_0 = arith.constant 0 : index
    %c0_1 = arith.constant 0 : index
    %c0_2 = arith.constant 0 : index
    %1 = vector.load %arg8[%c0, %c0_0, %c0_1, %c0_2] : memref<3x10x10x4xf32, #tpu.memory_space<vmem>>, vector<3x10x10x4xf32>
    tpu.vector_store %arg8[%c0, %c0_0, %c0_1, %c0_2], %0 {strides = array<i32>} : memref<3x10x10x4xf32, #tpu.memory_space<vmem>>, vector<3x10x10x4xf32>,
    %c0_3 = arith.constant 0 : index
    %c0_4 = arith.constant 0 : index
    %c0_5 = arith.constant 0 : index
    %c0_6 = arith.constant 0 : index
    %c0_7 = arith.constant 0 : index
    %2 = vector.load %arg2[%c0_3, %c0_4, %c0_5, %c0_6, %c0_7] : memref<1x3x8x8x4xf32, #tpu.memory_space<vmem>>, vector<1x3x8x8x4xf32>
    %3 = vector.shape_cast %2 : vector<1x3x8x8x4xf32> to vector<3x8x8x4xf32>
    %c0_8 = arith.constant 0 : index
    %c1 = arith.constant 1 : index
    %c1_9 = arith.constant 1 : index
    %c0_10 = arith.constant 0 : index
    %4 = vector.load %arg8[%c0_8, %c1, %c1_9, %c0_10] : memref<3x10x10x4xf32, #tpu.memory_space<vmem>>, vector<3x8x8x4xf32>
    tpu.vector_store %arg8[%c0_8, %c1, %c1_9, %c0_10], %3 {strides = array<i32>} : memref<3x10x10x4xf32, #tpu.memory_space<vmem>>, vector<3x8x8x4xf32>,
    %c0_11 = arith.constant 0 : index
    %c0_12 = arith.constant 0 : index
    %c0_13 = arith.constant 0 : index
    %c0_14 = arith.constant 0 : index
    %5 = vector.load %arg8[%c0_11, %c0_12, %c0_13, %c0_14] : memref<3x10x10x4xf32, #tpu.memory_space<vmem>>, vector<3x10x10x4xf32>
    %6 = vector.extract_strided_slice %5 {offsets = [0, 0, 0, 0], sizes = [3, 8, 8, 4], strides = [1, 1, 1, 1]} : vector<3x10x10x4xf32> to vector<3x8x8x4xf32>
    %7 = vector.extract_strided_slice %5 {offsets = [0, 0, 1, 0], sizes = [3, 8, 8, 4], strides = [1, 1, 1, 1]} : vector<3x10x10x4xf32> to vector<3x8x8x4xf32>
    %8 = vector.extract_strided_slice %5 {offsets = [0, 0, 2, 0], sizes = [3, 8, 8, 4], strides = [1, 1, 1, 1]} : vector<3x10x10x4xf32> to vector<3x8x8x4xf32>
    %9 = vector.extract_strided_slice %5 {offsets = [0, 1, 0, 0], sizes = [3, 8, 8, 4], strides = [1, 1, 1, 1]} : vector<3x10x10x4xf32> to vector<3x8x8x4xf32>
    %10 = vector.extract_strided_slice %5 {offsets = [0, 1, 1, 0], sizes = [3, 8, 8, 4], strides = [1, 1, 1, 1]} : vector<3x10x10x4xf32> to vector<3x8x8x4xf32>
    %11 = vector.extract_strided_slice %5 {offsets = [0, 1, 2, 0], sizes = [3, 8, 8, 4], strides = [1, 1, 1, 1]} : vector<3x10x10x4xf32> to vector<3x8x8x4xf32>
    %12 = vector.extract_strided_slice %5 {offsets = [0, 2, 0, 0], sizes = [3, 8, 8, 4], strides = [1, 1, 1, 1]} : vector<3x10x10x4xf32> to vector<3x8x8x4xf32>
    %13 = vector.extract_strided_slice %5 {offsets = [0, 2, 1, 0], sizes = [3, 8, 8, 4], strides = [1, 1, 1, 1]} : vector<3x10x10x4xf32> to vector<3x8x8x4xf32>
    %14 = vector.extract_strided_slice %5 {offsets = [0, 2, 2, 0], sizes = [3, 8, 8, 4], strides = [1, 1, 1, 1]} : vector<3x10x10x4xf32> to vector<3x8x8x4xf32>
    %15 = tpu.concatenate %6, %7, %8, %9, %10, %11, %12, %13, %14 in 3 : vector<3x8x8x4xf32>, vector<3x8x8x4xf32>, vector<3x8x8x4xf32>, vector<3x8x8x4xf32>, vector<3x8x8x4xf32>, vector<3x8x8x4xf32>, vector<3x8x8x4xf32>, vector<3x8x8x4xf32>, vector<3x8x8x4xf32> -> vector<3x8x8x36xf32>
    %16 = vector.shape_cast %15 : vector<3x8x8x36xf32> to vector<192x36xf32>
    %c0_15 = arith.constant 0 : index
    %c0_16 = arith.constant 0 : index
    %17 = vector.load %arg3[%c0_15, %c0_16] : memref<36x16xf32, #tpu.memory_space<vmem>>, vector<36x16xf32>
    %cst_17 = arith.constant dense<0.000000e+00> : vector<192x16xf32>
    %18 = tpu.matmul %16, %17, %cst_17 {dimension_numbers = #tpu.dot_dimension_numbers<[1], [0], [0], [1], [0, 0, 1, 1], [], []>} : vector<192x36xf32>, vector<36x16xf32>, vector<192x16xf32> -> vector<192x16xf32>
    %c0_18 = arith.constant 0 : index
    %c0_19 = arith.constant 0 : index
    %19 = vector.load %arg4[%c0_18, %c0_19] : memref<1x16xf32, #tpu.memory_space<vmem>>, vector<1x16xf32>
    %20 = vector.broadcast %19 : vector<1x16xf32> to vector<192x16xf32>
    %21 = arith.addf %18, %20 : vector<192x16xf32>
    %cst_20 = arith.constant dense<0.000000e+00> : vector<16xf32>
    %22 = vector.multi_reduction <add>, %21, %cst_20 [0] : vector<192x16xf32> to vector<16xf32>
    %23 = vector.shape_cast %22 : vector<16xf32> to vector<1x16xf32>
    %c0_21 = arith.constant 0 : index
    %c0_22 = arith.constant 0 : index
    %c0_23 = arith.constant 0 : index
    %c0_24 = arith.constant 0 : index
    %24 = vector.load %arg6[%c0_21, %c0_22, %c0_23, %c0_24] : memref<1x1x1x16xf32, #tpu.memory_space<vmem>>, vector<1x1x1x16xf32>
    %25 = vector.shape_cast %24 : vector<1x1x1x16xf32> to vector<1x16xf32>
    %26 = vector.shape_cast %23 : vector<1x16xf32> to vector<1x1x1x16xf32>
    tpu.vector_store %arg6[%c0_21, %c0_22, %c0_23, %c0_24], %26 {strides = array<i32>} : memref<1x1x1x16xf32, #tpu.memory_space<vmem>>, vector<1x1x1x16xf32>,
    %27 = arith.mulf %21, %21 : vector<192x16xf32>
    %cst_25 = arith.constant dense<0.000000e+00> : vector<16xf32>
    %28 = vector.multi_reduction <add>, %27, %cst_25 [0] : vector<192x16xf32> to vector<16xf32>
    %29 = vector.shape_cast %28 : vector<16xf32> to vector<1x16xf32>
    %c0_26 = arith.constant 0 : index
    %c0_27 = arith.constant 0 : index
    %c0_28 = arith.constant 0 : index
    %c0_29 = arith.constant 0 : index
    %30 = vector.load %arg7[%c0_26, %c0_27, %c0_28, %c0_29] : memref<1x1x1x16xf32, #tpu.memory_space<vmem>>, vector<1x1x1x16xf32>
    %31 = vector.shape_cast %30 : vector<1x1x1x16xf32> to vector<1x16xf32>
    %32 = vector.shape_cast %29 : vector<1x16xf32> to vector<1x1x1x16xf32>
    tpu.vector_store %arg7[%c0_26, %c0_27, %c0_28, %c0_29], %32 {strides = array<i32>} : memref<1x1x1x16xf32, #tpu.memory_space<vmem>>, vector<1x1x1x16xf32>,
    %33 = vector.shape_cast %21 : vector<192x16xf32> to vector<24x8x16xf32>
    %34 = vector.extract_strided_slice %33 {offsets = [0, 0, 0], sizes = [24, 1, 16], strides = [1, 1, 1]} : vector<24x8x16xf32> to vector<24x1x16xf32>
    %35 = vector.shape_cast %34 : vector<24x1x16xf32> to vector<24x16xf32>
    %36 = vector.extract_strided_slice %33 {offsets = [0, 1, 0], sizes = [24, 1, 16], strides = [1, 1, 1]} : vector<24x8x16xf32> to vector<24x1x16xf32>
    %37 = vector.shape_cast %36 : vector<24x1x16xf32> to vector<24x16xf32>
    %38 = vector.extract_strided_slice %33 {offsets = [0, 2, 0], sizes = [24, 1, 16], strides = [1, 1, 1]} : vector<24x8x16xf32> to vector<24x1x16xf32>
    %39 = vector.shape_cast %38 : vector<24x1x16xf32> to vector<24x16xf32>
    %40 = vector.extract_strided_slice %33 {offsets = [0, 3, 0], sizes = [24, 1, 16], strides = [1, 1, 1]} : vector<24x8x16xf32> to vector<24x1x16xf32>
    %41 = vector.shape_cast %40 : vector<24x1x16xf32> to vector<24x16xf32>
    %42 = vector.extract_strided_slice %33 {offsets = [0, 4, 0], sizes = [24, 1, 16], strides = [1, 1, 1]} : vector<24x8x16xf32> to vector<24x1x16xf32>
    %43 = vector.shape_cast %42 : vector<24x1x16xf32> to vector<24x16xf32>
    %44 = vector.extract_strided_slice %33 {offsets = [0, 5, 0], sizes = [24, 1, 16], strides = [1, 1, 1]} : vector<24x8x16xf32> to vector<24x1x16xf32>
    %45 = vector.shape_cast %44 : vector<24x1x16xf32> to vector<24x16xf32>
    %46 = vector.extract_strided_slice %33 {offsets = [0, 6, 0], sizes = [24, 1, 16], strides = [1, 1, 1]} : vector<24x8x16xf32> to vector<24x1x16xf32>
    %47 = vector.shape_cast %46 : vector<24x1x16xf32> to vector<24x16xf32>
    %48 = vector.extract_strided_slice %33 {offsets = [0, 7, 0], sizes = [24, 1, 16], strides = [1, 1, 1]} : vector<24x8x16xf32> to vector<24x1x16xf32>
    %49 = vector.shape_cast %48 : vector<24x1x16xf32> to vector<24x16xf32>
    %50 = tpu.concatenate %35, %37, %39, %41, %43, %45, %47, %49 in 1 : vector<24x16xf32>, vector<24x16xf32>, vector<24x16xf32>, vector<24x16xf32>, vector<24x16xf32>, vector<24x16xf32>, vector<24x16xf32>, vector<24x16xf32> -> vector<24x128xf32>
    %51 = vector.shape_cast %50 : vector<24x128xf32> to vector<1x3x8x128xf32>
    %c0_30 = arith.constant 0 : index
    %c0_31 = arith.constant 0 : index
    %c0_32 = arith.constant 0 : index
    %c0_33 = arith.constant 0 : index
    %52 = vector.load %arg5[%c0_30, %c0_31, %c0_32, %c0_33] : memref<1x3x8x128xf32, #tpu.memory_space<vmem>>, vector<1x3x8x128xf32>
    tpu.vector_store %arg5[%c0_30, %c0_31, %c0_32, %c0_33], %51 {strides = array<i32>} : memref<1x3x8x128xf32, #tpu.memory_space<vmem>>, vector<1x3x8x128xf32>,
    return
  }
  func.func @transform_0(%arg0: i32, %arg1: i32) -> (i32, i32, i32, i32, i32) {
    %c0_i32 = arith.constant 0 : i32
    %c0_i32_0 = arith.constant 0 : i32
    %c0_i32_1 = arith.constant 0 : i32
    %c0_i32_2 = arith.constant 0 : i32
    return %arg0, %arg1, %c0_i32, %c0_i32_0, %c0_i32_1 : i32, i32, i32, i32, i32
  }
  func.func @transform_1(%arg0: i32, %arg1: i32) -> (i32, i32) {
    %c0_i32 = arith.constant 0 : i32
    %c0_i32_0 = arith.constant 0 : i32
    %c0_i32_1 = arith.constant 0 : i32
    return %c0_i32, %c0_i32_0 : i32, i32
  }
  func.func @transform_2(%arg0: i32, %arg1: i32) -> (i32, i32) {
    %c0_i32 = arith.constant 0 : i32
    %c0_i32_0 = arith.constant 0 : i32
    %c0_i32_1 = arith.constant 0 : i32
    return %c0_i32, %c0_i32_0 : i32, i32
  }
  func.func @transform_3(%arg0: i32, %arg1: i32) -> (i32, i32, i32, i32) {
    %c0_i32 = arith.constant 0 : i32
    %c0_i32_0 = arith.constant 0 : i32
    %c0_i32_1 = arith.constant 0 : i32
    return %arg0, %arg1, %c0_i32, %c0_i32_0 : i32, i32, i32, i32
  }
  func.func @transform_4(%arg0: i32, %arg1: i32) -> (i32, i32, i32, i32) {
    %c0_i32 = arith.constant 0 : i32
    %c0_i32_0 = arith.constant 0 : i32
    %c0_i32_1 = arith.constant 0 : i32
    return %arg0, %arg1, %c0_i32, %c0_i32_0 : i32, i32, i32, i32
  }
  func.func @transform_5(%arg0: i32, %arg1: i32) -> (i32, i32, i32, i32) {
    %c0_i32 = arith.constant 0 : i32
    %c0_i32_0 = arith.constant 0 : i32
    %c0_i32_1 = arith.constant 0 : i32
    return %arg0, %arg1, %c0_i32, %c0_i32_0 : i32, i32, i32, i32
  }
}

</mosaic_0001>

<llo_original>
// kernel: tpu_custom_call.1
$region0: #{tpu_custom_call.1}
  #allocation0 [shape = 'u32[]', space=smem, size = 0x4, offset = 0x4, fixed_abs, tag = 'smem constant byte address 0x4 - core index']
  #allocation1 [shape = 'u32[72,128]{1,0:T(1,128)}', space=vmem, size = 0x9000, scoped, tag = 'internal scratch']
  #allocation2 [shape = 'f32[3,10,10,4]{3,2,1,0:T(8,128)}', space=vmem, size = 0x3c000, scoped, tag = 'scratch operand']
  %s0 = inlined_call_operand.vmem [shape: f32[2,3,8,8,4], index: 0, kind: input, shape index: {}]
  %s1 = inlined_call_operand.vmem [shape: f32[36,16], index: 1, kind: input, shape index: {}]
  %s2 = inlined_call_operand.vmem [shape: f32[1,16], index: 2, kind: input, shape index: {}]
  %s3 = inlined_call_operand.hbm [shape: f32[2,3,8,128], index: 3, kind: output, shape index: {0}]
  %s4 = inlined_call_operand.hbm [shape: f32[2,1,1,16], index: 4, kind: output, shape index: {1}]
  %s5 = inlined_call_operand.hbm [shape: f32[2,1,1,16], index: 5, kind: output, shape index: {2}]
  %6 = xla_tuple %s3, %s4, %s5
  %s7 = sld [smem:[#allocation0]]
  $region61: #{tpu_custom_call.1} parent=0
    _
  %s9 = ssub.s32 1, %s7
  %s10 = scalar_select 0, %s9, %s7
  $region1: #{tpu_custom_call.1} parent=0
    #allocation3 [shape = 'u8[24576]{0}', space=vmem, size = 0x6000, scoped, tag = 'output window, operand 0']
    #allocation4 [shape = 's32[2]{0}', space=sflag, size = 0x8, scoped, tag = 'scoped memory for tpu_custom_call.1']
    #allocation5 [shape = 'u8[1024]{0}', space=vmem, size = 0x400, scoped, tag = 'output window, operand 1']
    #allocation6 [shape = 's32[2]{0}', space=sflag, size = 0x8, scoped, tag = 'scoped memory for tpu_custom_call.1']
    #allocation7 [shape = 'u8[1024]{0}', space=vmem, size = 0x400, scoped, tag = 'output window, operand 2']
    %11 = vsyncpa [#allocation4], 0
    %s12 = scalar_lea.sflag [#allocation4], 1
    %13 = vsyncpa %s12, 0
    %14 = vsyncpa [#allocation6], 0
    %s15 = scalar_lea.sflag [#allocation6], 1
    %16 = vsyncpa %s15, 0
    loop: start=0, step=1, limit=4
    $region2: #{tpu_custom_call.1} parent=1 // loop_pre_header
      _
    $region3: #{tpu_custom_call.1} parent=1 // loop_header
      %s18 = sphi 0, %s22
      %p19 = scmp.ge.s32.totalorder %s18, 4
      %s25 = sphi 0, %s37
      %s26 = sphi 0, %s33
      %s27 = sphi 0, %s25
      %s28 = sphi 0, %s26
      %s29 = sphi 0, %s27
      %s30 = sphi 0, %s28
      %s42 = sphi 0, %s44
      %s45 = sphi 0, %s42
      %s46 = sphi 0, %s45
      %s62 = sphi 0, %s46
      %s66 = sphi 0, %s66
      %s68 = sphi 0, %s66
      %s69 = sphi 0, %s68
      %s83 = sphi 0, %s69
      %s87 = sphi 0, %s87
      %s89 = sphi 0, %s87
      %s90 = sphi 0, %s89
      %s104 = sphi 0, %s90
      %s112 = sphi 0, %s114
      %s115 = sphi 0, %s112
      %s116 = sphi 0, %s115
      %s132 = sphi 0, %s116
      %s140 = sphi 0, %s142
      %s143 = sphi 0, %s140
      %s144 = sphi 0, %s143
      %s160 = sphi 0, %s144
      %s168 = sphi 0, %s170
      %s171 = sphi 0, %s168
      %s172 = sphi 0, %s171
      %s188 = sphi 0, %s172
    $region4: #{tpu_custom_call.1} parent=1 // loop_header_branch
      %21 = sbr.rel (%p19) target = $region8
    $region5: #{tpu_custom_call.1} parent=1 // loop_body
      %s23 = ssub.s32 %s18, 1
      %s24 = ssub.s32 %s18, 2
      %s31 = sadd.s32 1, %s26
      %p32 = scmp.ge.s32.totalorder %s31, 1
      %s33 = scalar_select %p32, 0, %s31
      %s34 = sadd.s32 1, %s25
      %s35 = scalar_select %p32, %s34, %s25
      %p36 = scmp.ge.s32.totalorder %s35, 2
      %s37 = scalar_select %p36, 0, %s35
      %s38 = ssub.s32 %s25, %s37
      %s39 = ssub.s32 %s26, %s33
      %s40 = sor.u32 %s38, %s39
      %p41 = scmp.eq.s32.totalorder %s40, 0
      %s43 = sadd.s32 %s42, 1
      %s44 = scalar_select %p41, %s42, %s43
      %p47 = pneg %p41
      %p48 = scmp.eq.s32.totalorder %s18, 1
      %p49 = por %p47, %p48
      %p50 = scmp.ne.s32.totalorder %s42, %s45
      %p51 = scmp.eq.s32.totalorder %s18, 0
      %p52 = por %p50, %p51
      %p53 = scmp.ne.s32.totalorder %s42, %s45
      %p54 = scmp.eq.s32.totalorder %s23, 1
      %p55 = por %p53, %p54
      %p56 = scmp.ne.s32.totalorder %s45, %s46
      %p57 = scmp.eq.s32.totalorder %s23, 0
      %p58 = por %p56, %p57
      %p59 = scmp.ne.s32.totalorder %s45, %s46
      %p60 = scmp.eq.s32.totalorder %s24, 1
      %p61 = por %p59, %p60
      %p63 = scmp.ne.s32.totalorder %s46, %s62
      %p64 = scmp.eq.s32.totalorder %s24, 0
      %p65 = por %p63, %p64
      %s67 = sadd.s32 %s66, 1
      %p70 = scmp.eq.s32.totalorder %s18, 1
      %p71 = scmp.ne.s32.totalorder %s66, %s68
      %p72 = scmp.eq.s32.totalorder %s18, 0
      %p73 = por %p71, %p72
      %p74 = scmp.ne.s32.totalorder %s66, %s68
      %p75 = scmp.eq.s32.totalorder %s23, 1
      %p76 = por %p74, %p75
      %p77 = scmp.ne.s32.totalorder %s68, %s69
      %p78 = scmp.eq.s32.totalorder %s23, 0
      %p79 = por %p77, %p78
      %p80 = scmp.ne.s32.totalorder %s68, %s69
      %p81 = scmp.eq.s32.totalorder %s24, 1
      %p82 = por %p80, %p81
      %p84 = scmp.ne.s32.totalorder %s69, %s83
      %p85 = scmp.eq.s32.totalorder %s24, 0
      %p86 = por %p84, %p85
      %s88 = sadd.s32 %s87, 1
      %p91 = scmp.eq.s32.totalorder %s18, 1
      %p92 = scmp.ne.s32.totalorder %s87, %s89
      %p93 = scmp.eq.s32.totalorder %s18, 0
      %p94 = por %p92, %p93
      %p95 = scmp.ne.s32.totalorder %s87, %s89
      %p96 = scmp.eq.s32.totalorder %s23, 1
      %p97 = por %p95, %p96
      %p98 = scmp.ne.s32.totalorder %s89, %s90
      %p99 = scmp.eq.s32.totalorder %s23, 0
      %p100 = por %p98, %p99
      %p101 = scmp.ne.s32.totalorder %s89, %s90
      %p102 = scmp.eq.s32.totalorder %s24, 1
      %p103 = por %p101, %p102
      %p105 = scmp.ne.s32.totalorder %s90, %s104
      %p106 = scmp.eq.s32.totalorder %s24, 0
      %p107 = por %p105, %p106
      %s108 = ssub.s32 %s25, %s37
      %s109 = ssub.s32 %s26, %s33
      %s110 = sor.u32 %s108, %s109
      %p111 = scmp.eq.s32.totalorder %s110, 0
      %s113 = sadd.s32 %s112, 1
      %s114 = scalar_select %p111, %s112, %s113
      %p117 = pneg %p111
      %p118 = scmp.eq.s32.totalorder %s18, 1
      %p119 = por %p117, %p118
      %p120 = scmp.ne.s32.totalorder %s112, %s115
      %p121 = scmp.eq.s32.totalorder %s18, 0
      %p122 = por %p120, %p121
      %p123 = scmp.ne.s32.totalorder %s112, %s115
      %p124 = scmp.eq.s32.totalorder %s23, 1
      %p125 = por %p123, %p124
      %p126 = scmp.ne.s32.totalorder %s115, %s116
      %p127 = scmp.eq.s32.totalorder %s23, 0
      %p128 = por %p126, %p127
      %p129 = scmp.ne.s32.totalorder %s115, %s116
      %p130 = scmp.eq.s32.totalorder %s24, 1
      %p131 = por %p129, %p130
      %p133 = scmp.ne.s32.totalorder %s116, %s132
      %p134 = scmp.eq.s32.totalorder %s24, 0
      %p135 = por %p133, %p134
      %s136 = ssub.s32 %s25, %s37
      %s137 = ssub.s32 %s26, %s33
      %s138 = sor.u32 %s136, %s137
      %p139 = scmp.eq.s32.totalorder %s138, 0
      %s141 = sadd.s32 %s140, 1
      %s142 = scalar_select %p139, %s140, %s141
      %p145 = pneg %p139
      %p146 = scmp.eq.s32.totalorder %s18, 1
      %p147 = por %p145, %p146
      %p148 = scmp.ne.s32.totalorder %s140, %s143
      %p149 = scmp.eq.s32.totalorder %s18, 0
      %p150 = por %p148, %p149
      %p151 = scmp.ne.s32.totalorder %s140, %s143
      %p152 = scmp.eq.s32.totalorder %s23, 1
      %p153 = por %p151, %p152
      %p154 = scmp.ne.s32.totalorder %s143, %s144
      %p155 = scmp.eq.s32.totalorder %s23, 0
      %p156 = por %p154, %p155
      %p157 = scmp.ne.s32.totalorder %s143, %s144
      %p158 = scmp.eq.s32.totalorder %s24, 1
      %p159 = por %p157, %p158
      %p161 = scmp.ne.s32.totalorder %s144, %s160
      %p162 = scmp.eq.s32.totalorder %s24, 0
      %p163 = por %p161, %p162
      %s164 = ssub.s32 %s25, %s37
      %s165 = ssub.s32 %s26, %s33
      %s166 = sor.u32 %s164, %s165
      %p167 = scmp.eq.s32.totalorder %s166, 0
      %s169 = sadd.s32 %s168, 1
      %s170 = scalar_select %p167, %s168, %s169
      %p173 = pneg %p167
      %p174 = scmp.eq.s32.totalorder %s18, 1
      %p175 = por %p173, %p174
      %p176 = scmp.ne.s32.totalorder %s168, %s171
      %p177 = scmp.eq.s32.totalorder %s18, 0
      %p178 = por %p176, %p177
      %p179 = scmp.ne.s32.totalorder %s168, %s171
      %p180 = scmp.eq.s32.totalorder %s23, 1
      %p181 = por %p179, %p180
      %p182 = scmp.ne.s32.totalorder %s171, %s172
      %p183 = scmp.eq.s32.totalorder %s23, 0
      %p184 = por %p182, %p183
      %p185 = scmp.ne.s32.totalorder %s171, %s172
      %p186 = scmp.eq.s32.totalorder %s24, 1
      %p187 = por %p185, %p186
      %p189 = scmp.ne.s32.totalorder %s172, %s188
      %p190 = scmp.eq.s32.totalorder %s24, 0
      %p191 = por %p189, %p190
      %p192 = scmp.le.s32.totalorder 1, %s18
      %p193 = scmp.lt.s32.totalorder %s18, 3
      %p194 = pnand %p192, %p193
      %p195 = pneg %p194
      // Predicated region
      $region9: #{tpu_custom_call.1} parent=5 // pred_check
        _
      $region10: #{tpu_custom_call.1} parent=5 // pred_check_branch
        %197 = sbr.rel (%p194) target = $region12
      $region11: #{tpu_custom_call.1} parent=5 // pred_region
        %s198 = ssub.s32 %s18, 1
        // Predicated region
        $region13: #{tpu_custom_call.1} parent=11 // pred_check
          %p199 = pneg %p79
        $region14: #{tpu_custom_call.1} parent=11 // pred_check_branch
          %201 = sbr.rel (%p199) target = $region16
        $region15: #{tpu_custom_call.1} parent=11 // pred_region
          _
        $region16: #{tpu_custom_call.1} parent=11 // pred_fallthru
          _
        // Predicated region
        $region17: #{tpu_custom_call.1} parent=11 // pred_check
          %p202 = pneg %p100
        $region18: #{tpu_custom_call.1} parent=11 // pred_check_branch
          %204 = sbr.rel (%p202) target = $region20
        $region19: #{tpu_custom_call.1} parent=11 // pred_region
          _
        $region20: #{tpu_custom_call.1} parent=11 // pred_fallthru
          _
      $region12: #{tpu_custom_call.1} parent=5 // pred_fallthru
        _
      %p205 = scmp.lt.s32.totalorder %s18, 2
      // Predicated region
      $region21: #{tpu_custom_call.1} parent=5 // pred_check
        %p206 = pneg %p205
      $region22: #{tpu_custom_call.1} parent=5 // pred_check_branch
        %208 = sbr.rel (%p206) target = $region24
      $region23: #{tpu_custom_call.1} parent=5 // pred_region
        // Predicated region
        $region25: #{tpu_custom_call.1} parent=23 // pred_check
          %p209 = pneg %p52
        $region26: #{tpu_custom_call.1} parent=23 // pred_check_branch
          %211 = sbr.rel (%p209) target = $region28
        $region27: #{tpu_custom_call.1} parent=23 // pred_region
          %s212 = smul.u32 3, %s26
          %p213 = scmp.lt.s32.totalorder %s25, 1
          %s214 = scalar_select %p213, %s25, 1
          %p215 = scmp.lt.s32.totalorder %s212, 2
          %s216 = scalar_select %p215, %s212, 2
          %s217 = smul.addr %s216, 8
          %s218 = smul.addr %s214, 24
          %s219 = sadd.s32 %s217, %s218
          %s220 = smul.addr %s219, 8
          %s221 = scalar_lea.vmem %s0, %s220
          %s222 = smul.u32 3, %s26
        $region28: #{tpu_custom_call.1} parent=23 // pred_fallthru
          _
      $region24: #{tpu_custom_call.1} parent=5 // pred_fallthru
        _
      %p223 = scmp.le.s32.totalorder 1, %s18
      %p224 = scmp.lt.s32.totalorder %s18, 3
      %p225 = pnand %p223, %p224
      %p226 = pneg %p225
      // Predicated region
      $region29: #{tpu_custom_call.1} parent=5 // pred_check
        _
      $region30: #{tpu_custom_call.1} parent=5 // pred_check_branch
        %228 = sbr.rel (%p225) target = $region32
      $region31: #{tpu_custom_call.1} parent=5 // pred_region
        %s229 = ssub.s32 %s18, 1
        %s230 = smul.u32 3, %s28
        %p231 = scmp.lt.s32.totalorder %s27, 1
        %s232 = scalar_select %p231, %s27, 1
        %p233 = scmp.lt.s32.totalorder %s230, 2
        %s234 = scalar_select %p233, %s230, 2
        %s235 = smul.addr %s234, 8
        %s236 = smul.addr %s232, 24
        %s237 = sadd.s32 %s235, %s236
        %s238 = smul.addr %s237, 8
        %s239 = scalar_lea.vmem %s0, %s238
        %p240 = pneg %p58
        %p241 = pneg %p55
        %p242 = pneg %p79
        %p243 = pneg %p76
        %p244 = pneg %p100
        %p245 = pneg %p97
        %p246 = pneg %p128
        %p247 = pneg %p125
        %s248 = sand.u32 %s115, 1
        %s249 = scalar_lea.sflag [#allocation4], %s248
        %s250 = sand.u32 %s115, 1
        %s251 = smul.addr %s250, 24
        %s252 = scalar_lea.vmem [#allocation3], %s251
        %p253 = pneg %p156
        %p254 = pneg %p153
        %s255 = sand.u32 %s23, 1
        %s256 = scalar_lea.sflag [#allocation6], %s255
        %s257 = sand.u32 %s143, 1
        %s258 = scalar_lea.vmem [#allocation5], %s257
        %p259 = pneg %p184
        %p260 = pneg %p181
        %s261 = sand.u32 %s23, 1
        %s262 = scalar_lea.sflag [#allocation6], %s261
        %s263 = sand.u32 %s171, 1
        %s264 = scalar_lea.vmem [#allocation7], %s263
        %s265 = smul.u32 3, %s28
        %p266 = scmp.lt.s32.totalorder %s27, 1
        %s267 = scalar_select %p266, %s27, 1
        %p268 = scmp.lt.s32.totalorder %s265, 2
        %s269 = scalar_select %p268, %s265, 2
        %s270 = smul.addr %s269, 8
        %s271 = smul.addr %s267, 24
        %s272 = sadd.s32 %s270, %s271
        %s273 = smul.addr %s272, 8
        %s274 = scalar_lea.vmem %s0, %s273
        %s275 = smul.u32 3, %s28
        %s276 = smul.u32 3, %s28
        %vm277 = vcmask 31744
        %278 = vst.msk [vmem:[#allocation2] sm:$0xff] %vm277, 0.0
        %vm279 = vcmask 25600
        %280 = vst.msk [vmem:[#allocation2 + $0x8] sm:$0x3] %vm279, 0.0
        %281 = vst.msk [vmem:[#allocation2 + $0x10] sm:$0xff] %vm277, 0.0
        %282 = vst.msk [vmem:[#allocation2 + $0x18] sm:$0x3] %vm279, 0.0
        %283 = vst.msk [vmem:[#allocation2 + $0x20] sm:$0xff] %vm277, 0.0
        %284 = vst.msk [vmem:[#allocation2 + $0x28] sm:$0x3] %vm279, 0.0
        %285 = vst.msk [vmem:[#allocation2 + $0x30] sm:$0xff] %vm277, 0.0
        %286 = vst.msk [vmem:[#allocation2 + $0x38] sm:$0x3] %vm279, 0.0
        %287 = vst.msk [vmem:[#allocation2 + $0x40] sm:$0xff] %vm277, 0.0
        %288 = vst.msk [vmem:[#allocation2 + $0x48] sm:$0x3] %vm279, 0.0
        %289 = vst.msk [vmem:[#allocation2 + $0x50] sm:$0xff] %vm277, 0.0
        %290 = vst.msk [vmem:[#allocation2 + $0x58] sm:$0x3] %vm279, 0.0
        %291 = vst.msk [vmem:[#allocation2 + $0x60] sm:$0xff] %vm277, 0.0
        %292 = vst.msk [vmem:[#allocation2 + $0x68] sm:$0x3] %vm279, 0.0
        %293 = vst.msk [vmem:[#allocation2 + $0x70] sm:$0xff] %vm277, 0.0
        %294 = vst.msk [vmem:[#allocation2 + $0x78] sm:$0x3] %vm279, 0.0
        %295 = vst.msk [vmem:[#allocation2 + $0x80] sm:$0xff] %vm277, 0.0
        %296 = vst.msk [vmem:[#allocation2 + $0x88] sm:$0x3] %vm279, 0.0
        %297 = vst.msk [vmem:[#allocation2 + $0x90] sm:$0xff] %vm277, 0.0
        %298 = vst.msk [vmem:[#allocation2 + $0x98] sm:$0x3] %vm279, 0.0
        %299 = vst.msk [vmem:[#allocation2 + $0xa0] sm:$0xff] %vm277, 0.0
        %300 = vst.msk [vmem:[#allocation2 + $0xa8] sm:$0x3] %vm279, 0.0
        %301 = vst.msk [vmem:[#allocation2 + $0xb0] sm:$0xff] %vm277, 0.0
        %302 = vst.msk [vmem:[#allocation2 + $0xb8] sm:$0x3] %vm279, 0.0
        %303 = vst.msk [vmem:[#allocation2 + $0xc0] sm:$0xff] %vm277, 0.0
        %304 = vst.msk [vmem:[#allocation2 + $0xc8] sm:$0x3] %vm279, 0.0
        %305 = vst.msk [vmem:[#allocation2 + $0xd0] sm:$0xff] %vm277, 0.0
        %306 = vst.msk [vmem:[#allocation2 + $0xd8] sm:$0x3] %vm279, 0.0
        %307 = vst.msk [vmem:[#allocation2 + $0xe0] sm:$0xff] %vm277, 0.0
        %308 = vst.msk [vmem:[#allocation2 + $0xe8] sm:$0x3] %vm279, 0.0
        %309 = vst.msk [vmem:[#allocation2 + $0xf0] sm:$0xff] %vm277, 0.0
        %310 = vst.msk [vmem:[#allocation2 + $0xf8] sm:$0x3] %vm279, 0.0
        %311 = vst.msk [vmem:[#allocation2 + $0x100] sm:$0xff] %vm277, 0.0
        %312 = vst.msk [vmem:[#allocation2 + $0x108] sm:$0x3] %vm279, 0.0
        %313 = vst.msk [vmem:[#allocation2 + $0x110] sm:$0xff] %vm277, 0.0
        %314 = vst.msk [vmem:[#allocation2 + $0x118] sm:$0x3] %vm279, 0.0
        %315 = vst.msk [vmem:[#allocation2 + $0x120] sm:$0xff] %vm277, 0.0
        %316 = vst.msk [vmem:[#allocation2 + $0x128] sm:$0x3] %vm279, 0.0
        %317 = vst.msk [vmem:[#allocation2 + $0x130] sm:$0xff] %vm277, 0.0
        %318 = vst.msk [vmem:[#allocation2 + $0x138] sm:$0x3] %vm279, 0.0
        %319 = vst.msk [vmem:[#allocation2 + $0x140] sm:$0xff] %vm277, 0.0
        %320 = vst.msk [vmem:[#allocation2 + $0x148] sm:$0x3] %vm279, 0.0
        %321 = vst.msk [vmem:[#allocation2 + $0x150] sm:$0xff] %vm277, 0.0
        %322 = vst.msk [vmem:[#allocation2 + $0x158] sm:$0x3] %vm279, 0.0
        %323 = vst.msk [vmem:[#allocation2 + $0x160] sm:$0xff] %vm277, 0.0
        %324 = vst.msk [vmem:[#allocation2 + $0x168] sm:$0x3] %vm279, 0.0
        %325 = vst.msk [vmem:[#allocation2 + $0x170] sm:$0xff] %vm277, 0.0
        %326 = vst.msk [vmem:[#allocation2 + $0x178] sm:$0x3] %vm279, 0.0
        %327 = vst.msk [vmem:[#allocation2 + $0x180] sm:$0xff] %vm277, 0.0
        %328 = vst.msk [vmem:[#allocation2 + $0x188] sm:$0x3] %vm279, 0.0
        %329 = vst.msk [vmem:[#allocation2 + $0x190] sm:$0xff] %vm277, 0.0
        %330 = vst.msk [vmem:[#allocation2 + $0x198] sm:$0x3] %vm279, 0.0
        %331 = vst.msk [vmem:[#allocation2 + $0x1a0] sm:$0xff] %vm277, 0.0
        %332 = vst.msk [vmem:[#allocation2 + $0x1a8] sm:$0x3] %vm279, 0.0
        %333 = vst.msk [vmem:[#allocation2 + $0x1b0] sm:$0xff] %vm277, 0.0
        %334 = vst.msk [vmem:[#allocation2 + $0x1b8] sm:$0x3] %vm279, 0.0
        %335 = vst.msk [vmem:[#allocation2 + $0x1c0] sm:$0xff] %vm277, 0.0
        %336 = vst.msk [vmem:[#allocation2 + $0x1c8] sm:$0x3] %vm279, 0.0
        %337 = vst.msk [vmem:[#allocation2 + $0x1d0] sm:$0xff] %vm277, 0.0
        %338 = vst.msk [vmem:[#allocation2 + $0x1d8] sm:$0x3] %vm279, 0.0
        %v339 = vld [vmem:[%s274] sm:$0xff]
        %v340 = vld [vmem:[%s274 + $0x8] sm:$0xff]
        %v341 = vld [vmem:[%s274 + $0x10] sm:$0xff]
        %v342 = vld [vmem:[%s274 + $0x18] sm:$0xff]
        %v343 = vld [vmem:[%s274 + $0x20] sm:$0xff]
        %v344 = vld [vmem:[%s274 + $0x28] sm:$0xff]
        %v345 = vld [vmem:[%s274 + $0x30] sm:$0xff]
        %v346 = vld [vmem:[%s274 + $0x38] sm:$0xff]
        %v347 = vld [vmem:[%s274 + $0x40] sm:$0xff]
        %v348 = vld [vmem:[%s274 + $0x48] sm:$0xff]
        %v349 = vld [vmem:[%s274 + $0x50] sm:$0xff]
        %v350 = vld [vmem:[%s274 + $0x58] sm:$0xff]
        %v351 = vld [vmem:[%s274 + $0x60] sm:$0xff]
        %v352 = vld [vmem:[%s274 + $0x68] sm:$0xff]
        %v353 = vld [vmem:[%s274 + $0x70] sm:$0xff]
        %v354 = vld [vmem:[%s274 + $0x78] sm:$0xff]
        %v355 = vld [vmem:[%s274 + $0x80] sm:$0xff]
        %v356 = vld [vmem:[%s274 + $0x88] sm:$0xff]
        %v357 = vld [vmem:[%s274 + $0x90] sm:$0xff]
        %v358 = vld [vmem:[%s274 + $0x98] sm:$0xff]
        %v359 = vld [vmem:[%s274 + $0xa0] sm:$0xff]
        %v360 = vld [vmem:[%s274 + $0xa8] sm:$0xff]
        %v361 = vld [vmem:[%s274 + $0xb0] sm:$0xff]
        %v362 = vld [vmem:[%s274 + $0xb8] sm:$0xff]
        %s363 = scalar_lea.vmem [#allocation2], 16
        %364 = vst.msk [vmem:[%s363 + $0x1] sm:$0xff] %vm277, %v339
        %365 = vst.msk [vmem:[%s363 + $0x11] sm:$0xff] %vm277, %v340
        %366 = vst.msk [vmem:[%s363 + $0x21] sm:$0xff] %vm277, %v341
        %367 = vst.msk [vmem:[%s363 + $0x31] sm:$0xff] %vm277, %v342
        %368 = vst.msk [vmem:[%s363 + $0x41] sm:$0xff] %vm277, %v343
        %369 = vst.msk [vmem:[%s363 + $0x51] sm:$0xff] %vm277, %v344
        %370 = vst.msk [vmem:[%s363 + $0x61] sm:$0xff] %vm277, %v345
        %371 = vst.msk [vmem:[%s363 + $0x71] sm:$0xff] %vm277, %v346
        %372 = vst.msk [vmem:[%s363 + $0xa1] sm:$0xff] %vm277, %v347
        %373 = vst.msk [vmem:[%s363 + $0xb1] sm:$0xff] %vm277, %v348
        %374 = vst.msk [vmem:[%s363 + $0xc1] sm:$0xff] %vm277, %v349
        %375 = vst.msk [vmem:[%s363 + $0xd1] sm:$0xff] %vm277, %v350
        %376 = vst.msk [vmem:[%s363 + $0xe1] sm:$0xff] %vm277, %v351
        %377 = vst.msk [vmem:[%s363 + $0xf1] sm:$0xff] %vm277, %v352
        %378 = vst.msk [vmem:[%s363 + $0x101] sm:$0xff] %vm277, %v353
        %379 = vst.msk [vmem:[%s363 + $0x111] sm:$0xff] %vm277, %v354
        %380 = vst.msk [vmem:[%s363 + $0x141] sm:$0xff] %vm277, %v355
        %381 = vst.msk [vmem:[%s363 + $0x151] sm:$0xff] %vm277, %v356
        %382 = vst.msk [vmem:[%s363 + $0x161] sm:$0xff] %vm277, %v357
        %383 = vst.msk [vmem:[%s363 + $0x171] sm:$0xff] %vm277, %v358
        %384 = vst.msk [vmem:[%s363 + $0x181] sm:$0xff] %vm277, %v359
        %385 = vst.msk [vmem:[%s363 + $0x191] sm:$0xff] %vm277, %v360
        %386 = vst.msk [vmem:[%s363 + $0x1a1] sm:$0xff] %vm277, %v361
        %387 = vst.msk [vmem:[%s363 + $0x1b1] sm:$0xff] %vm277, %v362
        %v388 = vld [vmem:[#allocation2] sm:$0xff]
        %v389 = vld [vmem:[#allocation2 + $0x8] sm:$0x3]
        %v390 = vld [vmem:[#allocation2 + $0x10] sm:$0xff]
        %v391 = vld [vmem:[#allocation2 + $0x18] sm:$0x3]
        %v392 = vld [vmem:[#allocation2 + $0x20] sm:$0xff]
        %v393 = vld [vmem:[#allocation2 + $0x28] sm:$0x3]
        %v394 = vld [vmem:[#allocation2 + $0x30] sm:$0xff]
        %v395 = vld [vmem:[#allocation2 + $0x38] sm:$0x3]
        %v396 = vld [vmem:[#allocation2 + $0x40] sm:$0xff]
        %v397 = vld [vmem:[#allocation2 + $0x48] sm:$0x3]
        %v398 = vld [vmem:[#allocation2 + $0x50] sm:$0xff]
        %v399 = vld [vmem:[#allocation2 + $0x58] sm:$0x3]
        %v400 = vld [vmem:[#allocation2 + $0x60] sm:$0xff]
        %v401 = vld [vmem:[#allocation2 + $0x68] sm:$0x3]
        %v402 = vld [vmem:[#allocation2 + $0x70] sm:$0xff]
        %v403 = vld [vmem:[#allocation2 + $0x78] sm:$0x3]
        %v404 = vld [vmem:[#allocation2 + $0x80] sm:$0xff]
        %v405 = vld [vmem:[#allocation2 + $0x88] sm:$0x3]
        %v406 = vld [vmem:[#allocation2 + $0x90] sm:$0xff]
        %v407 = vld [vmem:[#allocation2 + $0x98] sm:$0x3]
        %v408 = vld [vmem:[#allocation2 + $0xa0] sm:$0xff]
        %v409 = vld [vmem:[#allocation2 + $0xa8] sm:$0x3]
        %v410 = vld [vmem:[#allocation2 + $0xb0] sm:$0xff]
        %v411 = vld [vmem:[#allocation2 + $0xb8] sm:$0x3]
        %v412 = vld [vmem:[#allocation2 + $0xc0] sm:$0xff]
        %v413 = vld [vmem:[#allocation2 + $0xc8] sm:$0x3]
        %v414 = vld [vmem:[#allocation2 + $0xd0] sm:$0xff]
        %v415 = vld [vmem:[#allocation2 + $0xd8] sm:$0x3]
        %v416 = vld [vmem:[#allocation2 + $0xe0] sm:$0xff]
        %v417 = vld [vmem:[#allocation2 + $0xe8] sm:$0x3]
        %v418 = vld [vmem:[#allocation2 + $0xf0] sm:$0xff]
        %v419 = vld [vmem:[#allocation2 + $0xf8] sm:$0x3]
        %v420 = vld [vmem:[#allocation2 + $0x100] sm:$0xff]
        %v421 = vld [vmem:[#allocation2 + $0x108] sm:$0x3]
        %v422 = vld [vmem:[#allocation2 + $0x110] sm:$0xff]
        %v423 = vld [vmem:[#allocation2 + $0x118] sm:$0x3]
        %v424 = vld [vmem:[#allocation2 + $0x120] sm:$0xff]
        %v425 = vld [vmem:[#allocation2 + $0x128] sm:$0x3]
        %v426 = vld [vmem:[#allocation2 + $0x130] sm:$0xff]
        %v427 = vld [vmem:[#allocation2 + $0x138] sm:$0x3]
        %v428 = vld [vmem:[#allocation2 + $0x140] sm:$0xff]
        %v429 = vld [vmem:[#allocation2 + $0x148] sm:$0x3]
        %v430 = vld [vmem:[#allocation2 + $0x150] sm:$0xff]
        %v431 = vld [vmem:[#allocation2 + $0x158] sm:$0x3]
        %v432 = vld [vmem:[#allocation2 + $0x160] sm:$0xff]
        %v433 = vld [vmem:[#allocation2 + $0x168] sm:$0x3]
        %v434 = vld [vmem:[#allocation2 + $0x170] sm:$0xff]
        %v435 = vld [vmem:[#allocation2 + $0x178] sm:$0x3]
        %v436 = vld [vmem:[#allocation2 + $0x180] sm:$0xff]
        %v437 = vld [vmem:[#allocation2 + $0x188] sm:$0x3]
        %v438 = vld [vmem:[#allocation2 + $0x190] sm:$0xff]
        %v439 = vld [vmem:[#allocation2 + $0x198] sm:$0x3]
        %v440 = vld [vmem:[#allocation2 + $0x1a0] sm:$0xff]
        %v441 = vld [vmem:[#allocation2 + $0x1a8] sm:$0x3]
        %v442 = vld [vmem:[#allocation2 + $0x1b0] sm:$0xff]
        %v443 = vld [vmem:[#allocation2 + $0x1b8] sm:$0x3]
        %v444 = vld [vmem:[#allocation2 + $0x1c0] sm:$0xff]
        %v445 = vld [vmem:[#allocation2 + $0x1c8] sm:$0x3]
        %v446 = vld [vmem:[#allocation2 + $0x1d0] sm:$0xff]
        %v447 = vld [vmem:[#allocation2 + $0x1d8] sm:$0x3]
        %vm496 = vcmask 1046528
        %v497 = vrot.slane %v388, 1
        %v498 = vrot.slane %v389, 1
        %v499 = vsel %vm496, %v497, %v498
        %v500 = vrot.slane %v390, 1
        %v501 = vrot.slane %v391, 1
        %v502 = vsel %vm496, %v500, %v501
        %v503 = vrot.slane %v392, 1
        %v504 = vrot.slane %v393, 1
        %v505 = vsel %vm496, %v503, %v504
        %v506 = vrot.slane %v394, 1
        %v507 = vrot.slane %v395, 1
        %v508 = vsel %vm496, %v506, %v507
        %v509 = vrot.slane %v396, 1
        %v510 = vrot.slane %v397, 1
        %v511 = vsel %vm496, %v509, %v510
        %v512 = vrot.slane %v398, 1
        %v513 = vrot.slane %v399, 1
        %v514 = vsel %vm496, %v512, %v513
        %v515 = vrot.slane %v400, 1
        %v516 = vrot.slane %v401, 1
        %v517 = vsel %vm496, %v515, %v516
        %v518 = vrot.slane %v402, 1
        %v519 = vrot.slane %v403, 1
        %v520 = vsel %vm496, %v518, %v519
        %v521 = vrot.slane %v408, 1
        %v522 = vrot.slane %v409, 1
        %v523 = vsel %vm496, %v521, %v522
        %v524 = vrot.slane %v410, 1
        %v525 = vrot.slane %v411, 1
        %v526 = vsel %vm496, %v524, %v525
        %v527 = vrot.slane %v412, 1
        %v528 = vrot.slane %v413, 1
        %v529 = vsel %vm496, %v527, %v528
        %v530 = vrot.slane %v414, 1
        %v531 = vrot.slane %v415, 1
        %v532 = vsel %vm496, %v530, %v531
        %v533 = vrot.slane %v416, 1
        %v534 = vrot.slane %v417, 1
        %v535 = vsel %vm496, %v533, %v534
        %v536 = vrot.slane %v418, 1
        %v537 = vrot.slane %v419, 1
        %v538 = vsel %vm496, %v536, %v537
        %v539 = vrot.slane %v420, 1
        %v540 = vrot.slane %v421, 1
        %v541 = vsel %vm496, %v539, %v540
        %v542 = vrot.slane %v422, 1
        %v543 = vrot.slane %v423, 1
        %v544 = vsel %vm496, %v542, %v543
        %v545 = vrot.slane %v428, 1
        %v546 = vrot.slane %v429, 1
        %v547 = vsel %vm496, %v545, %v546
        %v548 = vrot.slane %v430, 1
        %v549 = vrot.slane %v431, 1
        %v550 = vsel %vm496, %v548, %v549
        %v551 = vrot.slane %v432, 1
        %v552 = vrot.slane %v433, 1
        %v553 = vsel %vm496, %v551, %v552
        %v554 = vrot.slane %v434, 1
        %v555 = vrot.slane %v435, 1
        %v556 = vsel %vm496, %v554, %v555
        %v557 = vrot.slane %v436, 1
        %v558 = vrot.slane %v437, 1
        %v559 = vsel %vm496, %v557, %v558
        %v560 = vrot.slane %v438, 1
        %v561 = vrot.slane %v439, 1
        %v562 = vsel %vm496, %v560, %v561
        %v563 = vrot.slane %v440, 1
        %v564 = vrot.slane %v441, 1
        %v565 = vsel %vm496, %v563, %v564
        %v566 = vrot.slane %v442, 1
        %v567 = vrot.slane %v443, 1
        %v568 = vsel %vm496, %v566, %v567
        %569 = vrot.lane.b32.xlu0 %v499, 4
        %v570 = vpop.permute.xlu0 %569
        %571 = vrot.lane.b32.xlu0 %v502, 4
        %v572 = vpop.permute.xlu0 %571
        %573 = vrot.lane.b32.xlu0 %v505, 4
        %v574 = vpop.permute.xlu0 %573
        %575 = vrot.lane.b32.xlu0 %v508, 4
        %v576 = vpop.permute.xlu0 %575
        %577 = vrot.lane.b32.xlu0 %v511, 4
        %v578 = vpop.permute.xlu0 %577
        %579 = vrot.lane.b32.xlu0 %v514, 4
        %v580 = vpop.permute.xlu0 %579
        %581 = vrot.lane.b32.xlu0 %v517, 4
        %v582 = vpop.permute.xlu0 %581
        %583 = vrot.lane.b32.xlu0 %v520, 4
        %v584 = vpop.permute.xlu0 %583
        %585 = vrot.lane.b32.xlu0 %v523, 4
        %v586 = vpop.permute.xlu0 %585
        %587 = vrot.lane.b32.xlu0 %v526, 4
        %v588 = vpop.permute.xlu0 %587
        %589 = vrot.lane.b32.xlu0 %v529, 4
        %v590 = vpop.permute.xlu0 %589
        %591 = vrot.lane.b32.xlu0 %v532, 4
        %v592 = vpop.permute.xlu0 %591
        %593 = vrot.lane.b32.xlu0 %v535, 4
        %v594 = vpop.permute.xlu0 %593
        %595 = vrot.lane.b32.xlu0 %v538, 4
        %v596 = vpop.permute.xlu0 %595
        %597 = vrot.lane.b32.xlu0 %v541, 4
        %v598 = vpop.permute.xlu0 %597
        %599 = vrot.lane.b32.xlu0 %v544, 4
        %v600 = vpop.permute.xlu0 %599
        %601 = vrot.lane.b32.xlu0 %v547, 4
        %v602 = vpop.permute.xlu0 %601
        %603 = vrot.lane.b32.xlu0 %v550, 4
        %v604 = vpop.permute.xlu0 %603
        %605 = vrot.lane.b32.xlu0 %v553, 4
        %v606 = vpop.permute.xlu0 %605
        %607 = vrot.lane.b32.xlu0 %v556, 4
        %v608 = vpop.permute.xlu0 %607
        %609 = vrot.lane.b32.xlu0 %v559, 4
        %v610 = vpop.permute.xlu0 %609
        %611 = vrot.lane.b32.xlu0 %v562, 4
        %v612 = vpop.permute.xlu0 %611
        %613 = vrot.lane.b32.xlu0 %v565, 4
        %v614 = vpop.permute.xlu0 %613
        %615 = vrot.lane.b32.xlu0 %v568, 4
        %v616 = vpop.permute.xlu0 %615
        %vm641 = vcmask 1045504
        %v642 = vrot.slane %v388, 2
        %v643 = vrot.slane %v389, 2
        %v644 = vsel %vm641, %v642, %v643
        %v645 = vrot.slane %v390, 2
        %v646 = vrot.slane %v391, 2
        %v647 = vsel %vm641, %v645, %v646
        %v648 = vrot.slane %v392, 2
        %v649 = vrot.slane %v393, 2
        %v650 = vsel %vm641, %v648, %v649
        %v651 = vrot.slane %v394, 2
        %v652 = vrot.slane %v395, 2
        %v653 = vsel %vm641, %v651, %v652
        %v654 = vrot.slane %v396, 2
        %v655 = vrot.slane %v397, 2
        %v656 = vsel %vm641, %v654, %v655
        %v657 = vrot.slane %v398, 2
        %v658 = vrot.slane %v399, 2
        %v659 = vsel %vm641, %v657, %v658
        %v660 = vrot.slane %v400, 2
        %v661 = vrot.slane %v401, 2
        %v662 = vsel %vm641, %v660, %v661
        %v663 = vrot.slane %v402, 2
        %v664 = vrot.slane %v403, 2
        %v665 = vsel %vm641, %v663, %v664
        %v666 = vrot.slane %v408, 2
        %v667 = vrot.slane %v409, 2
        %v668 = vsel %vm641, %v666, %v667
        %v669 = vrot.slane %v410, 2
        %v670 = vrot.slane %v411, 2
        %v671 = vsel %vm641, %v669, %v670
        %v672 = vrot.slane %v412, 2
        %v673 = vrot.slane %v413, 2
        %v674 = vsel %vm641, %v672, %v673
        %v675 = vrot.slane %v414, 2
        %v676 = vrot.slane %v415, 2
        %v677 = vsel %vm641, %v675, %v676
        %v678 = vrot.slane %v416, 2
        %v679 = vrot.slane %v417, 2
        %v680 = vsel %vm641, %v678, %v679
        %v681 = vrot.slane %v418, 2
        %v682 = vrot.slane %v419, 2
        %v683 = vsel %vm641, %v681, %v682
        %v684 = vrot.slane %v420, 2
        %v685 = vrot.slane %v421, 2
        %v686 = vsel %vm641, %v684, %v685
        %v687 = vrot.slane %v422, 2
        %v688 = vrot.slane %v423, 2
        %v689 = vsel %vm641, %v687, %v688
        %v690 = vrot.slane %v428, 2
        %v691 = vrot.slane %v429, 2
        %v692 = vsel %vm641, %v690, %v691
        %v693 = vrot.slane %v430, 2
        %v694 = vrot.slane %v431, 2
        %v695 = vsel %vm641, %v693, %v694
        %v696 = vrot.slane %v432, 2
        %v697 = vrot.slane %v433, 2
        %v698 = vsel %vm641, %v696, %v697
        %v699 = vrot.slane %v434, 2
        %v700 = vrot.slane %v435, 2
        %v701 = vsel %vm641, %v699, %v700
        %v702 = vrot.slane %v436, 2
        %v703 = vrot.slane %v437, 2
        %v704 = vsel %vm641, %v702, %v703
        %v705 = vrot.slane %v438, 2
        %v706 = vrot.slane %v439, 2
        %v707 = vsel %vm641, %v705, %v706
        %v708 = vrot.slane %v440, 2
        %v709 = vrot.slane %v441, 2
        %v710 = vsel %vm641, %v708, %v709
        %v711 = vrot.slane %v442, 2
        %v712 = vrot.slane %v443, 2
        %v713 = vsel %vm641, %v711, %v712
        %714 = vrot.lane.b32.xlu0 %v644, 8
        %v715 = vpop.permute.xlu0 %714
        %716 = vrot.lane.b32.xlu0 %v647, 8
        %v717 = vpop.permute.xlu0 %716
        %718 = vrot.lane.b32.xlu0 %v650, 8
        %v719 = vpop.permute.xlu0 %718
        %720 = vrot.lane.b32.xlu0 %v653, 8
        %v721 = vpop.permute.xlu0 %720
        %722 = vrot.lane.b32.xlu0 %v656, 8
        %v723 = vpop.permute.xlu0 %722
        %724 = vrot.lane.b32.xlu0 %v659, 8
        %v725 = vpop.permute.xlu0 %724
        %726 = vrot.lane.b32.xlu0 %v662, 8
        %v727 = vpop.permute.xlu0 %726
        %728 = vrot.lane.b32.xlu0 %v665, 8
        %v729 = vpop.permute.xlu0 %728
        %730 = vrot.lane.b32.xlu0 %v668, 8
        %v731 = vpop.permute.xlu0 %730
        %732 = vrot.lane.b32.xlu0 %v671, 8
        %v733 = vpop.permute.xlu0 %732
        %734 = vrot.lane.b32.xlu0 %v674, 8
        %v735 = vpop.permute.xlu0 %734
        %736 = vrot.lane.b32.xlu0 %v677, 8
        %v737 = vpop.permute.xlu0 %736
        %738 = vrot.lane.b32.xlu0 %v680, 8
        %v739 = vpop.permute.xlu0 %738
        %740 = vrot.lane.b32.xlu0 %v683, 8
        %v741 = vpop.permute.xlu0 %740
        %742 = vrot.lane.b32.xlu0 %v686, 8
        %v743 = vpop.permute.xlu0 %742
        %744 = vrot.lane.b32.xlu0 %v689, 8
        %v745 = vpop.permute.xlu0 %744
        %746 = vrot.lane.b32.xlu0 %v692, 8
        %v747 = vpop.permute.xlu0 %746
        %748 = vrot.lane.b32.xlu0 %v695, 8
        %v749 = vpop.permute.xlu0 %748
        %750 = vrot.lane.b32.xlu0 %v698, 8
        %v751 = vpop.permute.xlu0 %750
        %752 = vrot.lane.b32.xlu0 %v701, 8
        %v753 = vpop.permute.xlu0 %752
        %754 = vrot.lane.b32.xlu0 %v704, 8
        %v755 = vpop.permute.xlu0 %754
        %756 = vrot.lane.b32.xlu0 %v707, 8
        %v757 = vpop.permute.xlu0 %756
        %758 = vrot.lane.b32.xlu0 %v710, 8
        %v759 = vpop.permute.xlu0 %758
        %760 = vrot.lane.b32.xlu0 %v713, 8
        %v761 = vpop.permute.xlu0 %760
        %789 = vrot.lane.b32.xlu0 %v390, 12
        %v790 = vpop.permute.xlu0 %789
        %791 = vrot.lane.b32.xlu0 %v392, 12
        %v792 = vpop.permute.xlu0 %791
        %793 = vrot.lane.b32.xlu0 %v394, 12
        %v794 = vpop.permute.xlu0 %793
        %795 = vrot.lane.b32.xlu0 %v396, 12
        %v796 = vpop.permute.xlu0 %795
        %797 = vrot.lane.b32.xlu0 %v398, 12
        %v798 = vpop.permute.xlu0 %797
        %799 = vrot.lane.b32.xlu0 %v400, 12
        %v800 = vpop.permute.xlu0 %799
        %801 = vrot.lane.b32.xlu0 %v402, 12
        %v802 = vpop.permute.xlu0 %801
        %803 = vrot.lane.b32.xlu0 %v404, 12
        %v804 = vpop.permute.xlu0 %803
        %805 = vrot.lane.b32.xlu0 %v410, 12
        %v806 = vpop.permute.xlu0 %805
        %807 = vrot.lane.b32.xlu0 %v412, 12
        %v808 = vpop.permute.xlu0 %807
        %809 = vrot.lane.b32.xlu0 %v414, 12
        %v810 = vpop.permute.xlu0 %809
        %811 = vrot.lane.b32.xlu0 %v416, 12
        %v812 = vpop.permute.xlu0 %811
        %813 = vrot.lane.b32.xlu0 %v418, 12
        %v814 = vpop.permute.xlu0 %813
        %815 = vrot.lane.b32.xlu0 %v420, 12
        %v816 = vpop.permute.xlu0 %815
        %817 = vrot.lane.b32.xlu0 %v422, 12
        %v818 = vpop.permute.xlu0 %817
        %819 = vrot.lane.b32.xlu0 %v424, 12
        %v820 = vpop.permute.xlu0 %819
        %821 = vrot.lane.b32.xlu0 %v430, 12
        %v822 = vpop.permute.xlu0 %821
        %823 = vrot.lane.b32.xlu0 %v432, 12
        %v824 = vpop.permute.xlu0 %823
        %825 = vrot.lane.b32.xlu0 %v434, 12
        %v826 = vpop.permute.xlu0 %825
        %827 = vrot.lane.b32.xlu0 %v436, 12
        %v828 = vpop.permute.xlu0 %827
        %829 = vrot.lane.b32.xlu0 %v438, 12
        %v830 = vpop.permute.xlu0 %829
        %831 = vrot.lane.b32.xlu0 %v440, 12
        %v832 = vpop.permute.xlu0 %831
        %833 = vrot.lane.b32.xlu0 %v442, 12
        %v834 = vpop.permute.xlu0 %833
        %835 = vrot.lane.b32.xlu0 %v444, 12
        %v836 = vpop.permute.xlu0 %835
        %v864 = vrot.slane %v404, 1
        %v865 = vrot.slane %v405, 1
        %v866 = vsel %vm496, %v864, %v865
        %v867 = vrot.slane %v424, 1
        %v868 = vrot.slane %v425, 1
        %v869 = vsel %vm496, %v867, %v868
        %v870 = vrot.slane %v444, 1
        %v871 = vrot.slane %v445, 1
        %v872 = vsel %vm496, %v870, %v871
        %873 = vrot.lane.b32.xlu0 %v502, 16
        %v874 = vpop.permute.xlu0 %873
        %875 = vrot.lane.b32.xlu0 %v505, 16
        %v876 = vpop.permute.xlu0 %875
        %877 = vrot.lane.b32.xlu0 %v508, 16
        %v878 = vpop.permute.xlu0 %877
        %879 = vrot.lane.b32.xlu0 %v511, 16
        %v880 = vpop.permute.xlu0 %879
        %881 = vrot.lane.b32.xlu0 %v514, 16
        %v882 = vpop.permute.xlu0 %881
        %883 = vrot.lane.b32.xlu0 %v517, 16
        %v884 = vpop.permute.xlu0 %883
        %885 = vrot.lane.b32.xlu0 %v520, 16
        %v886 = vpop.permute.xlu0 %885
        %887 = vrot.lane.b32.xlu0 %v866, 16
        %v888 = vpop.permute.xlu0 %887
        %889 = vrot.lane.b32.xlu0 %v526, 16
        %v890 = vpop.permute.xlu0 %889
        %891 = vrot.lane.b32.xlu0 %v529, 16
        %v892 = vpop.permute.xlu0 %891
        %893 = vrot.lane.b32.xlu0 %v532, 16
        %v894 = vpop.permute.xlu0 %893
        %895 = vrot.lane.b32.xlu0 %v535, 16
        %v896 = vpop.permute.xlu0 %895
        %897 = vrot.lane.b32.xlu0 %v538, 16
        %v898 = vpop.permute.xlu0 %897
        %899 = vrot.lane.b32.xlu0 %v541, 16
        %v900 = vpop.permute.xlu0 %899
        %901 = vrot.lane.b32.xlu0 %v544, 16
        %v902 = vpop.permute.xlu0 %901
        %903 = vrot.lane.b32.xlu0 %v869, 16
        %v904 = vpop.permute.xlu0 %903
        %905 = vrot.lane.b32.xlu0 %v550, 16
        %v906 = vpop.permute.xlu0 %905
        %907 = vrot.lane.b32.xlu0 %v553, 16
        %v908 = vpop.permute.xlu0 %907
        %909 = vrot.lane.b32.xlu0 %v556, 16
        %v910 = vpop.permute.xlu0 %909
        %911 = vrot.lane.b32.xlu0 %v559, 16
        %v912 = vpop.permute.xlu0 %911
        %913 = vrot.lane.b32.xlu0 %v562, 16
        %v914 = vpop.permute.xlu0 %913
        %915 = vrot.lane.b32.xlu0 %v565, 16
        %v916 = vpop.permute.xlu0 %915
        %917 = vrot.lane.b32.xlu0 %v568, 16
        %v918 = vpop.permute.xlu0 %917
        %919 = vrot.lane.b32.xlu0 %v872, 16
        %v920 = vpop.permute.xlu0 %919
        %v945 = vrot.slane %v404, 2
        %v946 = vrot.slane %v405, 2
        %v947 = vsel %vm641, %v945, %v946
        %v948 = vrot.slane %v424, 2
        %v949 = vrot.slane %v425, 2
        %v950 = vsel %vm641, %v948, %v949
        %v951 = vrot.slane %v444, 2
        %v952 = vrot.slane %v445, 2
        %v953 = vsel %vm641, %v951, %v952
        %954 = vrot.lane.b32.xlu0 %v647, 20
        %v955 = vpop.permute.xlu0 %954
        %956 = vrot.lane.b32.xlu0 %v650, 20
        %v957 = vpop.permute.xlu0 %956
        %958 = vrot.lane.b32.xlu0 %v653, 20
        %v959 = vpop.permute.xlu0 %958
        %960 = vrot.lane.b32.xlu0 %v656, 20
        %v961 = vpop.permute.xlu0 %960
        %962 = vrot.lane.b32.xlu0 %v659, 20
        %v963 = vpop.permute.xlu0 %962
        %964 = vrot.lane.b32.xlu0 %v662, 20
        %v965 = vpop.permute.xlu0 %964
        %966 = vrot.lane.b32.xlu0 %v665, 20
        %v967 = vpop.permute.xlu0 %966
        %968 = vrot.lane.b32.xlu0 %v947, 20
        %v969 = vpop.permute.xlu0 %968
        %970 = vrot.lane.b32.xlu0 %v671, 20
        %v971 = vpop.permute.xlu0 %970
        %972 = vrot.lane.b32.xlu0 %v674, 20
        %v973 = vpop.permute.xlu0 %972
        %974 = vrot.lane.b32.xlu0 %v677, 20
        %v975 = vpop.permute.xlu0 %974
        %976 = vrot.lane.b32.xlu0 %v680, 20
        %v977 = vpop.permute.xlu0 %976
        %978 = vrot.lane.b32.xlu0 %v683, 20
        %v979 = vpop.permute.xlu0 %978
        %980 = vrot.lane.b32.xlu0 %v686, 20
        %v981 = vpop.permute.xlu0 %980
        %982 = vrot.lane.b32.xlu0 %v689, 20
        %v983 = vpop.permute.xlu0 %982
        %984 = vrot.lane.b32.xlu0 %v950, 20
        %v985 = vpop.permute.xlu0 %984
        %986 = vrot.lane.b32.xlu0 %v695, 20
        %v987 = vpop.permute.xlu0 %986
        %988 = vrot.lane.b32.xlu0 %v698, 20
        %v989 = vpop.permute.xlu0 %988
        %990 = vrot.lane.b32.xlu0 %v701, 20
        %v991 = vpop.permute.xlu0 %990
        %992 = vrot.lane.b32.xlu0 %v704, 20
        %v993 = vpop.permute.xlu0 %992
        %994 = vrot.lane.b32.xlu0 %v707, 20
        %v995 = vpop.permute.xlu0 %994
        %996 = vrot.lane.b32.xlu0 %v710, 20
        %v997 = vpop.permute.xlu0 %996
        %998 = vrot.lane.b32.xlu0 %v713, 20
        %v999 = vpop.permute.xlu0 %998
        %1000 = vrot.lane.b32.xlu0 %v953, 20
        %v1001 = vpop.permute.xlu0 %1000
        %1029 = vrot.lane.b32.xlu0 %v392, 24
        %v1030 = vpop.permute.xlu0 %1029
        %1031 = vrot.lane.b32.xlu0 %v394, 24
        %v1032 = vpop.permute.xlu0 %1031
        %1033 = vrot.lane.b32.xlu0 %v396, 24
        %v1034 = vpop.permute.xlu0 %1033
        %1035 = vrot.lane.b32.xlu0 %v398, 24
        %v1036 = vpop.permute.xlu0 %1035
        %1037 = vrot.lane.b32.xlu0 %v400, 24
        %v1038 = vpop.permute.xlu0 %1037
        %1039 = vrot.lane.b32.xlu0 %v402, 24
        %v1040 = vpop.permute.xlu0 %1039
        %1041 = vrot.lane.b32.xlu0 %v404, 24
        %v1042 = vpop.permute.xlu0 %1041
        %1043 = vrot.lane.b32.xlu0 %v406, 24
        %v1044 = vpop.permute.xlu0 %1043
        %1045 = vrot.lane.b32.xlu0 %v412, 24
        %v1046 = vpop.permute.xlu0 %1045
        %1047 = vrot.lane.b32.xlu0 %v414, 24
        %v1048 = vpop.permute.xlu0 %1047
        %1049 = vrot.lane.b32.xlu0 %v416, 24
        %v1050 = vpop.permute.xlu0 %1049
        %1051 = vrot.lane.b32.xlu0 %v418, 24
        %v1052 = vpop.permute.xlu0 %1051
        %1053 = vrot.lane.b32.xlu0 %v420, 24
        %v1054 = vpop.permute.xlu0 %1053
        %1055 = vrot.lane.b32.xlu0 %v422, 24
        %v1056 = vpop.permute.xlu0 %1055
        %1057 = vrot.lane.b32.xlu0 %v424, 24
        %v1058 = vpop.permute.xlu0 %1057
        %1059 = vrot.lane.b32.xlu0 %v426, 24
        %v1060 = vpop.permute.xlu0 %1059
        %1061 = vrot.lane.b32.xlu0 %v432, 24
        %v1062 = vpop.permute.xlu0 %1061
        %1063 = vrot.lane.b32.xlu0 %v434, 24
        %v1064 = vpop.permute.xlu0 %1063
        %1065 = vrot.lane.b32.xlu0 %v436, 24
        %v1066 = vpop.permute.xlu0 %1065
        %1067 = vrot.lane.b32.xlu0 %v438, 24
        %v1068 = vpop.permute.xlu0 %1067
        %1069 = vrot.lane.b32.xlu0 %v440, 24
        %v1070 = vpop.permute.xlu0 %1069
        %1071 = vrot.lane.b32.xlu0 %v442, 24
        %v1072 = vpop.permute.xlu0 %1071
        %1073 = vrot.lane.b32.xlu0 %v444, 24
        %v1074 = vpop.permute.xlu0 %1073
        %1075 = vrot.lane.b32.xlu0 %v446, 24
        %v1076 = vpop.permute.xlu0 %1075
        %v1104 = vrot.slane %v406, 1
        %v1105 = vrot.slane %v407, 1
        %v1106 = vsel %vm496, %v1104, %v1105
        %v1107 = vrot.slane %v426, 1
        %v1108 = vrot.slane %v427, 1
        %v1109 = vsel %vm496, %v1107, %v1108
        %v1110 = vrot.slane %v446, 1
        %v1111 = vrot.slane %v447, 1
        %v1112 = vsel %vm496, %v1110, %v1111
        %1113 = vrot.lane.b32.xlu0 %v505, 28
        %v1114 = vpop.permute.xlu0 %1113
        %1115 = vrot.lane.b32.xlu0 %v508, 28
        %v1116 = vpop.permute.xlu0 %1115
        %1117 = vrot.lane.b32.xlu0 %v511, 28
        %v1118 = vpop.permute.xlu0 %1117
        %1119 = vrot.lane.b32.xlu0 %v514, 28
        %v1120 = vpop.permute.xlu0 %1119
        %1121 = vrot.lane.b32.xlu0 %v517, 28
        %v1122 = vpop.permute.xlu0 %1121
        %1123 = vrot.lane.b32.xlu0 %v520, 28
        %v1124 = vpop.permute.xlu0 %1123
        %1125 = vrot.lane.b32.xlu0 %v866, 28
        %v1126 = vpop.permute.xlu0 %1125
        %1127 = vrot.lane.b32.xlu0 %v1106, 28
        %v1128 = vpop.permute.xlu0 %1127
        %1129 = vrot.lane.b32.xlu0 %v529, 28
        %v1130 = vpop.permute.xlu0 %1129
        %1131 = vrot.lane.b32.xlu0 %v532, 28
        %v1132 = vpop.permute.xlu0 %1131
        %1133 = vrot.lane.b32.xlu0 %v535, 28
        %v1134 = vpop.permute.xlu0 %1133
        %1135 = vrot.lane.b32.xlu0 %v538, 28
        %v1136 = vpop.permute.xlu0 %1135
        %1137 = vrot.lane.b32.xlu0 %v541, 28
        %v1138 = vpop.permute.xlu0 %1137
        %1139 = vrot.lane.b32.xlu0 %v544, 28
        %v1140 = vpop.permute.xlu0 %1139
        %1141 = vrot.lane.b32.xlu0 %v869, 28
        %v1142 = vpop.permute.xlu0 %1141
        %1143 = vrot.lane.b32.xlu0 %v1109, 28
        %v1144 = vpop.permute.xlu0 %1143
        %1145 = vrot.lane.b32.xlu0 %v553, 28
        %v1146 = vpop.permute.xlu0 %1145
        %1147 = vrot.lane.b32.xlu0 %v556, 28
        %v1148 = vpop.permute.xlu0 %1147
        %1149 = vrot.lane.b32.xlu0 %v559, 28
        %v1150 = vpop.permute.xlu0 %1149
        %1151 = vrot.lane.b32.xlu0 %v562, 28
        %v1152 = vpop.permute.xlu0 %1151
        %1153 = vrot.lane.b32.xlu0 %v565, 28
        %v1154 = vpop.permute.xlu0 %1153
        %1155 = vrot.lane.b32.xlu0 %v568, 28
        %v1156 = vpop.permute.xlu0 %1155
        %1157 = vrot.lane.b32.xlu0 %v872, 28
        %v1158 = vpop.permute.xlu0 %1157
        %1159 = vrot.lane.b32.xlu0 %v1112, 28
        %v1160 = vpop.permute.xlu0 %1159
        %v1185 = vrot.slane %v406, 2
        %v1186 = vrot.slane %v407, 2
        %v1187 = vsel %vm641, %v1185, %v1186
        %v1188 = vrot.slane %v426, 2
        %v1189 = vrot.slane %v427, 2
        %v1190 = vsel %vm641, %v1188, %v1189
        %v1191 = vrot.slane %v446, 2
        %v1192 = vrot.slane %v447, 2
        %v1193 = vsel %vm641, %v1191, %v1192
        %1194 = vrot.lane.b32.xlu0 %v650, 32
        %v1195 = vpop.permute.xlu0 %1194
        %1196 = vrot.lane.b32.xlu0 %v653, 32
        %v1197 = vpop.permute.xlu0 %1196
        %1198 = vrot.lane.b32.xlu0 %v656, 32
        %v1199 = vpop.permute.xlu0 %1198
        %1200 = vrot.lane.b32.xlu0 %v659, 32
        %v1201 = vpop.permute.xlu0 %1200
        %1202 = vrot.lane.b32.xlu0 %v662, 32
        %v1203 = vpop.permute.xlu0 %1202
        %1204 = vrot.lane.b32.xlu0 %v665, 32
        %v1205 = vpop.permute.xlu0 %1204
        %1206 = vrot.lane.b32.xlu0 %v947, 32
        %v1207 = vpop.permute.xlu0 %1206
        %1208 = vrot.lane.b32.xlu0 %v1187, 32
        %v1209 = vpop.permute.xlu0 %1208
        %1210 = vrot.lane.b32.xlu0 %v674, 32
        %v1211 = vpop.permute.xlu0 %1210
        %1212 = vrot.lane.b32.xlu0 %v677, 32
        %v1213 = vpop.permute.xlu0 %1212
        %1214 = vrot.lane.b32.xlu0 %v680, 32
        %v1215 = vpop.permute.xlu0 %1214
        %1216 = vrot.lane.b32.xlu0 %v683, 32
        %v1217 = vpop.permute.xlu0 %1216
        %1218 = vrot.lane.b32.xlu0 %v686, 32
        %v1219 = vpop.permute.xlu0 %1218
        %1220 = vrot.lane.b32.xlu0 %v689, 32
        %v1221 = vpop.permute.xlu0 %1220
        %1222 = vrot.lane.b32.xlu0 %v950, 32
        %v1223 = vpop.permute.xlu0 %1222
        %1224 = vrot.lane.b32.xlu0 %v1190, 32
        %v1225 = vpop.permute.xlu0 %1224
        %1226 = vrot.lane.b32.xlu0 %v698, 32
        %v1227 = vpop.permute.xlu0 %1226
        %1228 = vrot.lane.b32.xlu0 %v701, 32
        %v1229 = vpop.permute.xlu0 %1228
        %1230 = vrot.lane.b32.xlu0 %v704, 32
        %v1231 = vpop.permute.xlu0 %1230
        %1232 = vrot.lane.b32.xlu0 %v707, 32
        %v1233 = vpop.permute.xlu0 %1232
        %1234 = vrot.lane.b32.xlu0 %v710, 32
        %v1235 = vpop.permute.xlu0 %1234
        %1236 = vrot.lane.b32.xlu0 %v713, 32
        %v1237 = vpop.permute.xlu0 %1236
        %1238 = vrot.lane.b32.xlu0 %v953, 32
        %v1239 = vpop.permute.xlu0 %1238
        %1240 = vrot.lane.b32.xlu0 %v1193, 32
        %v1241 = vpop.permute.xlu0 %1240
        %v1266 = vsel %vm277, %v388, %v570
        %v1267 = vsel %vm277, %v390, %v572
        %v1268 = vsel %vm277, %v392, %v574
        %v1269 = vsel %vm277, %v394, %v576
        %v1270 = vsel %vm277, %v396, %v578
        %v1271 = vsel %vm277, %v398, %v580
        %v1272 = vsel %vm277, %v400, %v582
        %v1273 = vsel %vm277, %v402, %v584
        %v1274 = vsel %vm277, %v408, %v586
        %v1275 = vsel %vm277, %v410, %v588
        %v1276 = vsel %vm277, %v412, %v590
        %v1277 = vsel %vm277, %v414, %v592
        %v1278 = vsel %vm277, %v416, %v594
        %v1279 = vsel %vm277, %v418, %v596
        %v1280 = vsel %vm277, %v420, %v598
        %v1281 = vsel %vm277, %v422, %v600
        %v1282 = vsel %vm277, %v428, %v602
        %v1283 = vsel %vm277, %v430, %v604
        %v1284 = vsel %vm277, %v432, %v606
        %v1285 = vsel %vm277, %v434, %v608
        %v1286 = vsel %vm277, %v436, %v610
        %v1287 = vsel %vm277, %v438, %v612
        %v1288 = vsel %vm277, %v440, %v614
        %v1289 = vsel %vm277, %v442, %v616
        %vm1290 = vcmask 64512
        %v1291 = vsel %vm1290, %v1266, %v715
        %v1292 = vsel %vm1290, %v1267, %v717
        %v1293 = vsel %vm1290, %v1268, %v719
        %v1294 = vsel %vm1290, %v1269, %v721
        %v1295 = vsel %vm1290, %v1270, %v723
        %v1296 = vsel %vm1290, %v1271, %v725
        %v1297 = vsel %vm1290, %v1272, %v727
        %v1298 = vsel %vm1290, %v1273, %v729
        %v1299 = vsel %vm1290, %v1274, %v731
        %v1300 = vsel %vm1290, %v1275, %v733
        %v1301 = vsel %vm1290, %v1276, %v735
        %v1302 = vsel %vm1290, %v1277, %v737
        %v1303 = vsel %vm1290, %v1278, %v739
        %v1304 = vsel %vm1290, %v1279, %v741
        %v1305 = vsel %vm1290, %v1280, %v743
        %v1306 = vsel %vm1290, %v1281, %v745
        %v1307 = vsel %vm1290, %v1282, %v747
        %v1308 = vsel %vm1290, %v1283, %v749
        %v1309 = vsel %vm1290, %v1284, %v751
        %v1310 = vsel %vm1290, %v1285, %v753
        %v1311 = vsel %vm1290, %v1286, %v755
        %v1312 = vsel %vm1290, %v1287, %v757
        %v1313 = vsel %vm1290, %v1288, %v759
        %v1314 = vsel %vm1290, %v1289, %v761
        %vm1315 = vcmask 97280
        %v1316 = vsel %vm1315, %v1291, %v790
        %v1317 = vsel %vm1315, %v1292, %v792
        %v1318 = vsel %vm1315, %v1293, %v794
        %v1319 = vsel %vm1315, %v1294, %v796
        %v1320 = vsel %vm1315, %v1295, %v798
        %v1321 = vsel %vm1315, %v1296, %v800
        %v1322 = vsel %vm1315, %v1297, %v802
        %v1323 = vsel %vm1315, %v1298, %v804
        %v1324 = vsel %vm1315, %v1299, %v806
        %v1325 = vsel %vm1315, %v1300, %v808
        %v1326 = vsel %vm1315, %v1301, %v810
        %v1327 = vsel %vm1315, %v1302, %v812
        %v1328 = vsel %vm1315, %v1303, %v814
        %v1329 = vsel %vm1315, %v1304, %v816
        %v1330 = vsel %vm1315, %v1305, %v818
        %v1331 = vsel %vm1315, %v1306, %v820
        %v1332 = vsel %vm1315, %v1307, %v822
        %v1333 = vsel %vm1315, %v1308, %v824
        %v1334 = vsel %vm1315, %v1309, %v826
        %v1335 = vsel %vm1315, %v1310, %v828
        %v1336 = vsel %vm1315, %v1311, %v830
        %v1337 = vsel %vm1315, %v1312, %v832
        %v1338 = vsel %vm1315, %v1313, %v834
        %v1339 = vsel %vm1315, %v1314, %v836
        %vm1340 = vcmask 130048
        %v1341 = vsel %vm1340, %v1316, %v874
        %v1342 = vsel %vm1340, %v1317, %v876
        %v1343 = vsel %vm1340, %v1318, %v878
        %v1344 = vsel %vm1340, %v1319, %v880
        %v1345 = vsel %vm1340, %v1320, %v882
        %v1346 = vsel %vm1340, %v1321, %v884
        %v1347 = vsel %vm1340, %v1322, %v886
        %v1348 = vsel %vm1340, %v1323, %v888
        %v1349 = vsel %vm1340, %v1324, %v890
        %v1350 = vsel %vm1340, %v1325, %v892
        %v1351 = vsel %vm1340, %v1326, %v894
        %v1352 = vsel %vm1340, %v1327, %v896
        %v1353 = vsel %vm1340, %v1328, %v898
        %v1354 = vsel %vm1340, %v1329, %v900
        %v1355 = vsel %vm1340, %v1330, %v902
        %v1356 = vsel %vm1340, %v1331, %v904
        %v1357 = vsel %vm1340, %v1332, %v906
        %v1358 = vsel %vm1340, %v1333, %v908
        %v1359 = vsel %vm1340, %v1334, %v910
        %v1360 = vsel %vm1340, %v1335, %v912
        %v1361 = vsel %vm1340, %v1336, %v914
        %v1362 = vsel %vm1340, %v1337, %v916
        %v1363 = vsel %vm1340, %v1338, %v918
        %v1364 = vsel %vm1340, %v1339, %v920
        %vm1365 = vcmask 162816
        %v1366 = vsel %vm1365, %v1341, %v955
        %v1367 = vsel %vm1365, %v1342, %v957
        %v1368 = vsel %vm1365, %v1343, %v959
        %v1369 = vsel %vm1365, %v1344, %v961
        %v1370 = vsel %vm1365, %v1345, %v963
        %v1371 = vsel %vm1365, %v1346, %v965
        %v1372 = vsel %vm1365, %v1347, %v967
        %v1373 = vsel %vm1365, %v1348, %v969
        %v1374 = vsel %vm1365, %v1349, %v971
        %v1375 = vsel %vm1365, %v1350, %v973
        %v1376 = vsel %vm1365, %v1351, %v975
        %v1377 = vsel %vm1365, %v1352, %v977
        %v1378 = vsel %vm1365, %v1353, %v979
        %v1379 = vsel %vm1365, %v1354, %v981
        %v1380 = vsel %vm1365, %v1355, %v983
        %v1381 = vsel %vm1365, %v1356, %v985
        %v1382 = vsel %vm1365, %v1357, %v987
        %v1383 = vsel %vm1365, %v1358, %v989
        %v1384 = vsel %vm1365, %v1359, %v991
        %v1385 = vsel %vm1365, %v1360, %v993
        %v1386 = vsel %vm1365, %v1361, %v995
        %v1387 = vsel %vm1365, %v1362, %v997
        %v1388 = vsel %vm1365, %v1363, %v999
        %v1389 = vsel %vm1365, %v1364, %v1001
        %vm1390 = vcmask 195584
        %v1391 = vsel %vm1390, %v1366, %v1030
        %v1392 = vsel %vm1390, %v1367, %v1032
        %v1393 = vsel %vm1390, %v1368, %v1034
        %v1394 = vsel %vm1390, %v1369, %v1036
        %v1395 = vsel %vm1390, %v1370, %v1038
        %v1396 = vsel %vm1390, %v1371, %v1040
        %v1397 = vsel %vm1390, %v1372, %v1042
        %v1398 = vsel %vm1390, %v1373, %v1044
        %v1399 = vsel %vm1390, %v1374, %v1046
        %v1400 = vsel %vm1390, %v1375, %v1048
        %v1401 = vsel %vm1390, %v1376, %v1050
        %v1402 = vsel %vm1390, %v1377, %v1052
        %v1403 = vsel %vm1390, %v1378, %v1054
        %v1404 = vsel %vm1390, %v1379, %v1056
        %v1405 = vsel %vm1390, %v1380, %v1058
        %v1406 = vsel %vm1390, %v1381, %v1060
        %v1407 = vsel %vm1390, %v1382, %v1062
        %v1408 = vsel %vm1390, %v1383, %v1064
        %v1409 = vsel %vm1390, %v1384, %v1066
        %v1410 = vsel %vm1390, %v1385, %v1068
        %v1411 = vsel %vm1390, %v1386, %v1070
        %v1412 = vsel %vm1390, %v1387, %v1072
        %v1413 = vsel %vm1390, %v1388, %v1074
        %v1414 = vsel %vm1390, %v1389, %v1076
        %vm1415 = vcmask 228352
        %v1416 = vsel %vm1415, %v1391, %v1114
        %v1417 = vsel %vm1415, %v1392, %v1116
        %v1418 = vsel %vm1415, %v1393, %v1118
        %v1419 = vsel %vm1415, %v1394, %v1120
        %v1420 = vsel %vm1415, %v1395, %v1122
        %v1421 = vsel %vm1415, %v1396, %v1124
        %v1422 = vsel %vm1415, %v1397, %v1126
        %v1423 = vsel %vm1415, %v1398, %v1128
        %v1424 = vsel %vm1415, %v1399, %v1130
        %v1425 = vsel %vm1415, %v1400, %v1132
        %v1426 = vsel %vm1415, %v1401, %v1134
        %v1427 = vsel %vm1415, %v1402, %v1136
        %v1428 = vsel %vm1415, %v1403, %v1138
        %v1429 = vsel %vm1415, %v1404, %v1140
        %v1430 = vsel %vm1415, %v1405, %v1142
        %v1431 = vsel %vm1415, %v1406, %v1144
        %v1432 = vsel %vm1415, %v1407, %v1146
        %v1433 = vsel %vm1415, %v1408, %v1148
        %v1434 = vsel %vm1415, %v1409, %v1150
        %v1435 = vsel %vm1415, %v1410, %v1152
        %v1436 = vsel %vm1415, %v1411, %v1154
        %v1437 = vsel %vm1415, %v1412, %v1156
        %v1438 = vsel %vm1415, %v1413, %v1158
        %v1439 = vsel %vm1415, %v1414, %v1160
        %vm1440 = vcmask 261120
        %v1441 = vsel %vm1440, %v1416, %v1195
        %v1442 = vsel %vm1440, %v1417, %v1197
        %v1443 = vsel %vm1440, %v1418, %v1199
        %v1444 = vsel %vm1440, %v1419, %v1201
        %v1445 = vsel %vm1440, %v1420, %v1203
        %v1446 = vsel %vm1440, %v1421, %v1205
        %v1447 = vsel %vm1440, %v1422, %v1207
        %v1448 = vsel %vm1440, %v1423, %v1209
        %v1449 = vsel %vm1440, %v1424, %v1211
        %v1450 = vsel %vm1440, %v1425, %v1213
        %v1451 = vsel %vm1440, %v1426, %v1215
        %v1452 = vsel %vm1440, %v1427, %v1217
        %v1453 = vsel %vm1440, %v1428, %v1219
        %v1454 = vsel %vm1440, %v1429, %v1221
        %v1455 = vsel %vm1440, %v1430, %v1223
        %v1456 = vsel %vm1440, %v1431, %v1225
        %v1457 = vsel %vm1440, %v1432, %v1227
        %v1458 = vsel %vm1440, %v1433, %v1229
        %v1459 = vsel %vm1440, %v1434, %v1231
        %v1460 = vsel %vm1440, %v1435, %v1233
        %v1461 = vsel %vm1440, %v1436, %v1235
        %v1462 = vsel %vm1440, %v1437, %v1237
        %v1463 = vsel %vm1440, %v1438, %v1239
        %v1464 = vsel %vm1440, %v1439, %v1241
        %v1465 = vld [vmem:[%s1] sm:$0xff]
        %v1466 = vld [vmem:[%s1 + $0x8] sm:$0xff]
        %v1467 = vld [vmem:[%s1 + $0x10] sm:$0xff]
        %v1468 = vld [vmem:[%s1 + $0x18] sm:$0xff]
        %v1469 = vld [vmem:[%s1 + $0x20] sm:$0xf]
        %v1470 = vld [vmem:[%s2] sm:$0x1]
        %v1472 = vperm.slane %v1470, 0
        %vm1474 = vcmask 293888
        %v1476 = vsel %vm1474, %v1441, 0
        %v1479 = vsel %vm1474, %v1442, 0
        %v1482 = vsel %vm1474, %v1443, 0
        %v1485 = vsel %vm1474, %v1444, 0
        %v1488 = vsel %vm1474, %v1445, 0
        %v1491 = vsel %vm1474, %v1446, 0
        %v1494 = vsel %vm1474, %v1447, 0
        %v1497 = vsel %vm1474, %v1448, 0
        %v1500 = vsel %vm1474, %v1449, 0
        %v1503 = vsel %vm1474, %v1450, 0
        %v1506 = vsel %vm1474, %v1451, 0
        %v1509 = vsel %vm1474, %v1452, 0
        %v1512 = vsel %vm1474, %v1453, 0
        %v1515 = vsel %vm1474, %v1454, 0
        %v1518 = vsel %vm1474, %v1455, 0
        %v1521 = vsel %vm1474, %v1456, 0
        %v1524 = vsel %vm1474, %v1457, 0
        %v1527 = vsel %vm1474, %v1458, 0
        %v1530 = vsel %vm1474, %v1459, 0
        %v1533 = vsel %vm1474, %v1460, 0
        %v1536 = vsel %vm1474, %v1461, 0
        %v1539 = vsel %vm1474, %v1462, 0
        %v1542 = vsel %vm1474, %v1463, 0
        %v1545 = vsel %vm1474, %v1464, 0
        %vm1547 = vcmask 1043456
        %v1549 = vsel %vm1547, %v1469, 0
        %1551 = vmatpush.msra.mxu0 0.0
        %1552 = vmatpush.msra.mxu0 0.0
        %1553 = vmatpush.msra.mxu0 0.0
        %1554 = vmatpush.msra.mxu0 0.0
        %1555 = vmatpush.msra.mxu0 0.0
        %1556 = vmatpush.msra.mxu0 0.0
        %1557 = vmatpush.msra.mxu0 0.0
        %1558 = vmatpush.msra.mxu0 0.0
        %1559 = vmatpush.msra.mxu0 0.0
        %1560 = vmatpush.msra.mxu0 0.0
        %1561 = vmatpush.msra.mxu0 0.0
        %1562 = vmatpush.msra.mxu0 %v1549
        %1563 = vmatpush.msra.mxu0 %v1468
        %1564 = vmatpush.msra.mxu0 %v1467
        %1565 = vmatpush.msra.mxu0 %v1466
        %1566 = vmatpush.msra.mxu0 %v1465
        %1567 = vmatmul.f32.gmra.mxu0 %v1476
        %v1568 = vpop.f32.mrf.mxu0
        %v1569 = vadd.f32 %v1472, %v1568
        %1570 = vmatmul.f32.gmra.mxu0 %v1479
        %v1571 = vpop.f32.mrf.mxu0
        %v1572 = vadd.f32 %v1472, %v1571
        %1573 = vmatmul.f32.gmra.mxu0 %v1482
        %v1574 = vpop.f32.mrf.mxu0
        %v1575 = vadd.f32 %v1472, %v1574
        %1576 = vmatmul.f32.gmra.mxu0 %v1485
        %v1577 = vpop.f32.mrf.mxu0
        %v1578 = vadd.f32 %v1472, %v1577
        %1579 = vmatmul.f32.gmra.mxu0 %v1488
        %v1580 = vpop.f32.mrf.mxu0
        %v1581 = vadd.f32 %v1472, %v1580
        %1582 = vmatmul.f32.gmra.mxu0 %v1491
        %v1583 = vpop.f32.mrf.mxu0
        %v1584 = vadd.f32 %v1472, %v1583
        %1585 = vmatmul.f32.gmra.mxu0 %v1494
        %v1586 = vpop.f32.mrf.mxu0
        %v1587 = vadd.f32 %v1472, %v1586
        %1588 = vmatmul.f32.gmra.mxu0 %v1497
        %v1589 = vpop.f32.mrf.mxu0
        %v1590 = vadd.f32 %v1472, %v1589
        %1591 = vmatmul.f32.gmra.mxu0 %v1500
        %v1592 = vpop.f32.mrf.mxu0
        %v1593 = vadd.f32 %v1472, %v1592
        %1594 = vmatmul.f32.gmra.mxu0 %v1503
        %v1595 = vpop.f32.mrf.mxu0
        %v1596 = vadd.f32 %v1472, %v1595
        %1597 = vmatmul.f32.gmra.mxu0 %v1506
        %v1598 = vpop.f32.mrf.mxu0
        %v1599 = vadd.f32 %v1472, %v1598
        %1600 = vmatmul.f32.gmra.mxu0 %v1509
        %v1601 = vpop.f32.mrf.mxu0
        %v1602 = vadd.f32 %v1472, %v1601
        %1603 = vmatmul.f32.gmra.mxu0 %v1512
        %v1604 = vpop.f32.mrf.mxu0
        %v1605 = vadd.f32 %v1472, %v1604
        %1606 = vmatmul.f32.gmra.mxu0 %v1515
        %v1607 = vpop.f32.mrf.mxu0
        %v1608 = vadd.f32 %v1472, %v1607
        %1609 = vmatmul.f32.gmra.mxu0 %v1518
        %v1610 = vpop.f32.mrf.mxu0
        %v1611 = vadd.f32 %v1472, %v1610
        %1612 = vmatmul.f32.gmra.mxu0 %v1521
        %v1613 = vpop.f32.mrf.mxu0
        %v1614 = vadd.f32 %v1472, %v1613
        %1615 = vmatmul.f32.gmra.mxu0 %v1524
        %v1616 = vpop.f32.mrf.mxu0
        %v1617 = vadd.f32 %v1472, %v1616
        %1618 = vmatmul.f32.gmra.mxu0 %v1527
        %v1619 = vpop.f32.mrf.mxu0
        %v1620 = vadd.f32 %v1472, %v1619
        %1621 = vmatmul.f32.gmra.mxu0 %v1530
        %v1622 = vpop.f32.mrf.mxu0
        %v1623 = vadd.f32 %v1472, %v1622
        %1624 = vmatmul.f32.gmra.mxu0 %v1533
        %v1625 = vpop.f32.mrf.mxu0
        %v1626 = vadd.f32 %v1472, %v1625
        %1627 = vmatmul.f32.gmra.mxu0 %v1536
        %v1628 = vpop.f32.mrf.mxu0
        %v1629 = vadd.f32 %v1472, %v1628
        %1630 = vmatmul.f32.gmra.mxu0 %v1539
        %v1631 = vpop.f32.mrf.mxu0
        %v1632 = vadd.f32 %v1472, %v1631
        %1633 = vmatmul.f32.gmra.mxu0 %v1542
        %v1634 = vpop.f32.mrf.mxu0
        %v1635 = vadd.f32 %v1472, %v1634
        %1636 = vmatmul.f32.gmra.mxu0 %v1545
        %v1637 = vpop.f32.mrf.mxu0
        %v1638 = vadd.f32 %v1472, %v1637
        %1639 = vdwg.mxu0
        %v1640 = vsel %vm1340, %v1569, 0.0
        %v1641 = vsel %vm1340, %v1572, 0.0
        %v1642 = vadd.f32 %v1640, %v1641
        %v1643 = vsel %vm1340, %v1575, 0.0
        %v1644 = vadd.f32 %v1642, %v1643
        %v1645 = vsel %vm1340, %v1578, 0.0
        %v1646 = vadd.f32 %v1644, %v1645
        %v1647 = vsel %vm1340, %v1581, 0.0
        %v1648 = vadd.f32 %v1646, %v1647
        %v1649 = vsel %vm1340, %v1584, 0.0
        %v1650 = vadd.f32 %v1648, %v1649
        %v1651 = vsel %vm1340, %v1587, 0.0
        %v1652 = vadd.f32 %v1650, %v1651
        %v1653 = vsel %vm1340, %v1590, 0.0
        %v1654 = vadd.f32 %v1652, %v1653
        %v1655 = vsel %vm1340, %v1593, 0.0
        %v1656 = vadd.f32 %v1654, %v1655
        %v1657 = vsel %vm1340, %v1596, 0.0
        %v1658 = vadd.f32 %v1656, %v1657
        %v1659 = vsel %vm1340, %v1599, 0.0
        %v1660 = vadd.f32 %v1658, %v1659
        %v1661 = vsel %vm1340, %v1602, 0.0
        %v1662 = vadd.f32 %v1660, %v1661
        %v1663 = vsel %vm1340, %v1605, 0.0
        %v1664 = vadd.f32 %v1662, %v1663
        %v1665 = vsel %vm1340, %v1608, 0.0
        %v1666 = vadd.f32 %v1664, %v1665
        %v1667 = vsel %vm1340, %v1611, 0.0
        %v1668 = vadd.f32 %v1666, %v1667
        %v1669 = vsel %vm1340, %v1614, 0.0
        %v1670 = vadd.f32 %v1668, %v1669
        %v1671 = vsel %vm1340, %v1617, 0.0
        %v1672 = vadd.f32 %v1670, %v1671
        %v1673 = vsel %vm1340, %v1620, 0.0
        %v1674 = vadd.f32 %v1672, %v1673
        %v1675 = vsel %vm1340, %v1623, 0.0
        %v1676 = vadd.f32 %v1674, %v1675
        %v1677 = vsel %vm1340, %v1626, 0.0
        %v1678 = vadd.f32 %v1676, %v1677
        %v1679 = vsel %vm1340, %v1629, 0.0
        %v1680 = vadd.f32 %v1678, %v1679
        %v1681 = vsel %vm1340, %v1632, 0.0
        %v1682 = vadd.f32 %v1680, %v1681
        %v1683 = vsel %vm1340, %v1635, 0.0
        %v1684 = vadd.f32 %v1682, %v1683
        %v1685 = vsel %vm1340, %v1638, 0.0
        %v1686 = vadd.f32 %v1684, %v1685
        %v1687 = vrot.slane %v1686, 4
        %v1688 = vadd.f32 %v1686, %v1687
        %v1689 = vrot.slane %v1688, 2
        %v1690 = vadd.f32 %v1688, %v1689
        %v1691 = vrot.slane %v1690, 1
        %v1692 = vadd.f32 %v1690, %v1691
        %vm1693 = vcmask 122880
        %1694 = vst.msk [vmem:[%s258] sm:$0x1] %vm1693, %v1692
        %v1695 = vmul.f32 %v1569, %v1569
        %v1696 = vmul.f32 %v1572, %v1572
        %v1697 = vmul.f32 %v1575, %v1575
        %v1698 = vmul.f32 %v1578, %v1578
        %v1699 = vmul.f32 %v1581, %v1581
        %v1700 = vmul.f32 %v1584, %v1584
        %v1701 = vmul.f32 %v1587, %v1587
        %v1702 = vmul.f32 %v1590, %v1590
        %v1703 = vmul.f32 %v1593, %v1593
        %v1704 = vmul.f32 %v1596, %v1596
        %v1705 = vmul.f32 %v1599, %v1599
        %v1706 = vmul.f32 %v1602, %v1602
        %v1707 = vmul.f32 %v1605, %v1605
        %v1708 = vmul.f32 %v1608, %v1608
        %v1709 = vmul.f32 %v1611, %v1611
        %v1710 = vmul.f32 %v1614, %v1614
        %v1711 = vmul.f32 %v1617, %v1617
        %v1712 = vmul.f32 %v1620, %v1620
        %v1713 = vmul.f32 %v1623, %v1623
        %v1714 = vmul.f32 %v1626, %v1626
        %v1715 = vmul.f32 %v1629, %v1629
        %v1716 = vmul.f32 %v1632, %v1632
        %v1717 = vmul.f32 %v1635, %v1635
        %v1718 = vmul.f32 %v1638, %v1638
        %v1719 = vsel %vm1340, %v1695, 0.0
        %v1720 = vsel %vm1340, %v1696, 0.0
        %v1721 = vadd.f32 %v1719, %v1720
        %v1722 = vsel %vm1340, %v1697, 0.0
        %v1723 = vadd.f32 %v1721, %v1722
        %v1724 = vsel %vm1340, %v1698, 0.0
        %v1725 = vadd.f32 %v1723, %v1724
        %v1726 = vsel %vm1340, %v1699, 0.0
        %v1727 = vadd.f32 %v1725, %v1726
        %v1728 = vsel %vm1340, %v1700, 0.0
        %v1729 = vadd.f32 %v1727, %v1728
        %v1730 = vsel %vm1340, %v1701, 0.0
        %v1731 = vadd.f32 %v1729, %v1730
        %v1732 = vsel %vm1340, %v1702, 0.0
        %v1733 = vadd.f32 %v1731, %v1732
        %v1734 = vsel %vm1340, %v1703, 0.0
        %v1735 = vadd.f32 %v1733, %v1734
        %v1736 = vsel %vm1340, %v1704, 0.0
        %v1737 = vadd.f32 %v1735, %v1736
        %v1738 = vsel %vm1340, %v1705, 0.0
        %v1739 = vadd.f32 %v1737, %v1738
        %v1740 = vsel %vm1340, %v1706, 0.0
        %v1741 = vadd.f32 %v1739, %v1740
        %v1742 = vsel %vm1340, %v1707, 0.0
        %v1743 = vadd.f32 %v1741, %v1742
        %v1744 = vsel %vm1340, %v1708, 0.0
        %v1745 = vadd.f32 %v1743, %v1744
        %v1746 = vsel %vm1340, %v1709, 0.0
        %v1747 = vadd.f32 %v1745, %v1746
        %v1748 = vsel %vm1340, %v1710, 0.0
        %v1749 = vadd.f32 %v1747, %v1748
        %v1750 = vsel %vm1340, %v1711, 0.0
        %v1751 = vadd.f32 %v1749, %v1750
        %v1752 = vsel %vm1340, %v1712, 0.0
        %v1753 = vadd.f32 %v1751, %v1752
        %v1754 = vsel %vm1340, %v1713, 0.0
        %v1755 = vadd.f32 %v1753, %v1754
        %v1756 = vsel %vm1340, %v1714, 0.0
        %v1757 = vadd.f32 %v1755, %v1756
        %v1758 = vsel %vm1340, %v1715, 0.0
        %v1759 = vadd.f32 %v1757, %v1758
        %v1760 = vsel %vm1340, %v1716, 0.0
        %v1761 = vadd.f32 %v1759, %v1760
        %v1762 = vsel %vm1340, %v1717, 0.0
        %v1763 = vadd.f32 %v1761, %v1762
        %v1764 = vsel %vm1340, %v1718, 0.0
        %v1765 = vadd.f32 %v1763, %v1764
        %v1766 = vrot.slane %v1765, 4
        %v1767 = vadd.f32 %v1765, %v1766
        %v1768 = vrot.slane %v1767, 2
        %v1769 = vadd.f32 %v1767, %v1768
        %v1770 = vrot.slane %v1769, 1
        %v1771 = vadd.f32 %v1769, %v1770
        %1772 = vst.msk [vmem:[%s264] sm:$0x1] %vm1693, %v1771
        %v1797 = vrot.slane %v1572, 7
        %vm1798 = vcmask 1041409
        %v1799 = vsel %vm1798, %v1797, %v1569
        %v1800 = vrot.slane %v1575, 6
        %vm1801 = vcmask 1042434
        %v1802 = vsel %vm1801, %v1800, %v1799
        %v1803 = vrot.slane %v1578, 5
        %vm1804 = vcmask 1043459
        %v1805 = vsel %vm1804, %v1803, %v1802
        %v1806 = vrot.slane %v1581, 4
        %vm1807 = vcmask 1044484
        %v1808 = vsel %vm1807, %v1806, %v1805
        %v1809 = vrot.slane %v1584, 3
        %vm1810 = vcmask 1045509
        %v1811 = vsel %vm1810, %v1809, %v1808
        %v1812 = vrot.slane %v1587, 2
        %vm1813 = vcmask 1046534
        %v1814 = vsel %vm1813, %v1812, %v1811
        %v1815 = vrot.slane %v1590, 1
        %vm1816 = vcmask 1047559
        %v1817 = vsel %vm1816, %v1815, %v1814
        %v1818 = vrot.slane %v1596, 7
        %v1819 = vsel %vm1798, %v1818, %v1593
        %v1820 = vrot.slane %v1599, 6
        %v1821 = vsel %vm1801, %v1820, %v1819
        %v1822 = vrot.slane %v1602, 5
        %v1823 = vsel %vm1804, %v1822, %v1821
        %v1824 = vrot.slane %v1605, 4
        %v1825 = vsel %vm1807, %v1824, %v1823
        %v1826 = vrot.slane %v1608, 3
        %v1827 = vsel %vm1810, %v1826, %v1825
        %v1828 = vrot.slane %v1611, 2
        %v1829 = vsel %vm1813, %v1828, %v1827
        %v1830 = vrot.slane %v1614, 1
        %v1831 = vsel %vm1816, %v1830, %v1829
        %v1832 = vrot.slane %v1620, 7
        %v1833 = vsel %vm1798, %v1832, %v1617
        %v1834 = vrot.slane %v1623, 6
        %v1835 = vsel %vm1801, %v1834, %v1833
        %v1836 = vrot.slane %v1626, 5
        %v1837 = vsel %vm1804, %v1836, %v1835
        %v1838 = vrot.slane %v1629, 4
        %v1839 = vsel %vm1807, %v1838, %v1837
        %v1840 = vrot.slane %v1632, 3
        %v1841 = vsel %vm1810, %v1840, %v1839
        %v1842 = vrot.slane %v1635, 2
        %v1843 = vsel %vm1813, %v1842, %v1841
        %v1844 = vrot.slane %v1638, 1
        %v1845 = vsel %vm1816, %v1844, %v1843
        %v1849 = vrot.slane %v1569, 1
        %v1850 = vsel %vm1798, %v1572, %v1849
        %v1851 = vrot.slane %v1575, 7
        %v1852 = vsel %vm1801, %v1851, %v1850
        %v1853 = vrot.slane %v1578, 6
        %v1854 = vsel %vm1804, %v1853, %v1852
        %v1855 = vrot.slane %v1581, 5
        %v1856 = vsel %vm1807, %v1855, %v1854
        %v1857 = vrot.slane %v1584, 4
        %v1858 = vsel %vm1810, %v1857, %v1856
        %v1859 = vrot.slane %v1587, 3
        %v1860 = vsel %vm1813, %v1859, %v1858
        %v1861 = vrot.slane %v1590, 2
        %v1862 = vsel %vm1816, %v1861, %v1860
        %v1863 = vrot.slane %v1593, 1
        %v1864 = vsel %vm1798, %v1596, %v1863
        %v1865 = vrot.slane %v1599, 7
        %v1866 = vsel %vm1801, %v1865, %v1864
        %v1867 = vrot.slane %v1602, 6
        %v1868 = vsel %vm1804, %v1867, %v1866
        %v1869 = vrot.slane %v1605, 5
        %v1870 = vsel %vm1807, %v1869, %v1868
        %v1871 = vrot.slane %v1608, 4
        %v1872 = vsel %vm1810, %v1871, %v1870
        %v1873 = vrot.slane %v1611, 3
        %v1874 = vsel %vm1813, %v1873, %v1872
        %v1875 = vrot.slane %v1614, 2
        %v1876 = vsel %vm1816, %v1875, %v1874
        %v1877 = vrot.slane %v1617, 1
        %v1878 = vsel %vm1798, %v1620, %v1877
        %v1879 = vrot.slane %v1623, 7
        %v1880 = vsel %vm1801, %v1879, %v1878
        %v1881 = vrot.slane %v1626, 6
        %v1882 = vsel %vm1804, %v1881, %v1880
        %v1883 = vrot.slane %v1629, 5
        %v1884 = vsel %vm1807, %v1883, %v1882
        %v1885 = vrot.slane %v1632, 4
        %v1886 = vsel %vm1810, %v1885, %v1884
        %v1887 = vrot.slane %v1635, 3
        %v1888 = vsel %vm1813, %v1887, %v1886
        %v1889 = vrot.slane %v1638, 2
        %v1890 = vsel %vm1816, %v1889, %v1888
        %1891 = vrot.lane.b32.xlu0 %v1862, 16
        %v1892 = vpop.permute.xlu0 %1891
        %1893 = vrot.lane.b32.xlu0 %v1876, 16
        %v1894 = vpop.permute.xlu0 %1893
        %1895 = vrot.lane.b32.xlu0 %v1890, 16
        %v1896 = vpop.permute.xlu0 %1895
        %v1900 = vrot.slane %v1569, 2
        %v1901 = vrot.slane %v1572, 1
        %v1902 = vsel %vm1798, %v1901, %v1900
        %v1903 = vsel %vm1801, %v1575, %v1902
        %v1904 = vrot.slane %v1578, 7
        %v1905 = vsel %vm1804, %v1904, %v1903
        %v1906 = vrot.slane %v1581, 6
        %v1907 = vsel %vm1807, %v1906, %v1905
        %v1908 = vrot.slane %v1584, 5
        %v1909 = vsel %vm1810, %v1908, %v1907
        %v1910 = vrot.slane %v1587, 4
        %v1911 = vsel %vm1813, %v1910, %v1909
        %v1912 = vrot.slane %v1590, 3
        %v1913 = vsel %vm1816, %v1912, %v1911
        %v1914 = vrot.slane %v1593, 2
        %v1915 = vrot.slane %v1596, 1
        %v1916 = vsel %vm1798, %v1915, %v1914
        %v1917 = vsel %vm1801, %v1599, %v1916
        %v1918 = vrot.slane %v1602, 7
        %v1919 = vsel %vm1804, %v1918, %v1917
        %v1920 = vrot.slane %v1605, 6
        %v1921 = vsel %vm1807, %v1920, %v1919
        %v1922 = vrot.slane %v1608, 5
        %v1923 = vsel %vm1810, %v1922, %v1921
        %v1924 = vrot.slane %v1611, 4
        %v1925 = vsel %vm1813, %v1924, %v1923
        %v1926 = vrot.slane %v1614, 3
        %v1927 = vsel %vm1816, %v1926, %v1925
        %v1928 = vrot.slane %v1617, 2
        %v1929 = vrot.slane %v1620, 1
        %v1930 = vsel %vm1798, %v1929, %v1928
        %v1931 = vsel %vm1801, %v1623, %v1930
        %v1932 = vrot.slane %v1626, 7
        %v1933 = vsel %vm1804, %v1932, %v1931
        %v1934 = vrot.slane %v1629, 6
        %v1935 = vsel %vm1807, %v1934, %v1933
        %v1936 = vrot.slane %v1632, 5
        %v1937 = vsel %vm1810, %v1936, %v1935
        %v1938 = vrot.slane %v1635, 4
        %v1939 = vsel %vm1813, %v1938, %v1937
        %v1940 = vrot.slane %v1638, 3
        %v1941 = vsel %vm1816, %v1940, %v1939
        %1942 = vrot.lane.b32.xlu0 %v1913, 32
        %v1943 = vpop.permute.xlu0 %1942
        %1944 = vrot.lane.b32.xlu0 %v1927, 32
        %v1945 = vpop.permute.xlu0 %1944
        %1946 = vrot.lane.b32.xlu0 %v1941, 32
        %v1947 = vpop.permute.xlu0 %1946
        %v1951 = vrot.slane %v1569, 3
        %v1952 = vrot.slane %v1572, 2
        %v1953 = vsel %vm1798, %v1952, %v1951
        %v1954 = vrot.slane %v1575, 1
        %v1955 = vsel %vm1801, %v1954, %v1953
        %v1956 = vsel %vm1804, %v1578, %v1955
        %v1957 = vrot.slane %v1581, 7
        %v1958 = vsel %vm1807, %v1957, %v1956
        %v1959 = vrot.slane %v1584, 6
        %v1960 = vsel %vm1810, %v1959, %v1958
        %v1961 = vrot.slane %v1587, 5
        %v1962 = vsel %vm1813, %v1961, %v1960
        %v1963 = vrot.slane %v1590, 4
        %v1964 = vsel %vm1816, %v1963, %v1962
        %v1965 = vrot.slane %v1593, 3
        %v1966 = vrot.slane %v1596, 2
        %v1967 = vsel %vm1798, %v1966, %v1965
        %v1968 = vrot.slane %v1599, 1
        %v1969 = vsel %vm1801, %v1968, %v1967
        %v1970 = vsel %vm1804, %v1602, %v1969
        %v1971 = vrot.slane %v1605, 7
        %v1972 = vsel %vm1807, %v1971, %v1970
        %v1973 = vrot.slane %v1608, 6
        %v1974 = vsel %vm1810, %v1973, %v1972
        %v1975 = vrot.slane %v1611, 5
        %v1976 = vsel %vm1813, %v1975, %v1974
        %v1977 = vrot.slane %v1614, 4
        %v1978 = vsel %vm1816, %v1977, %v1976
        %v1979 = vrot.slane %v1617, 3
        %v1980 = vrot.slane %v1620, 2
        %v1981 = vsel %vm1798, %v1980, %v1979
        %v1982 = vrot.slane %v1623, 1
        %v1983 = vsel %vm1801, %v1982, %v1981
        %v1984 = vsel %vm1804, %v1626, %v1983
        %v1985 = vrot.slane %v1629, 7
        %v1986 = vsel %vm1807, %v1985, %v1984
        %v1987 = vrot.slane %v1632, 6
        %v1988 = vsel %vm1810, %v1987, %v1986
        %v1989 = vrot.slane %v1635, 5
        %v1990 = vsel %vm1813, %v1989, %v1988
        %v1991 = vrot.slane %v1638, 4
        %v1992 = vsel %vm1816, %v1991, %v1990
        %1993 = vrot.lane.b32.xlu0 %v1964, 48
        %v1994 = vpop.permute.xlu0 %1993
        %1995 = vrot.lane.b32.xlu0 %v1978, 48
        %v1996 = vpop.permute.xlu0 %1995
        %1997 = vrot.lane.b32.xlu0 %v1992, 48
        %v1998 = vpop.permute.xlu0 %1997
        %v2002 = vrot.slane %v1569, 4
        %v2003 = vrot.slane %v1572, 3
        %v2004 = vsel %vm1798, %v2003, %v2002
        %v2005 = vrot.slane %v1575, 2
        %v2006 = vsel %vm1801, %v2005, %v2004
        %v2007 = vrot.slane %v1578, 1
        %v2008 = vsel %vm1804, %v2007, %v2006
        %v2009 = vsel %vm1807, %v1581, %v2008
        %v2010 = vrot.slane %v1584, 7
        %v2011 = vsel %vm1810, %v2010, %v2009
        %v2012 = vrot.slane %v1587, 6
        %v2013 = vsel %vm1813, %v2012, %v2011
        %v2014 = vrot.slane %v1590, 5
        %v2015 = vsel %vm1816, %v2014, %v2013
        %v2016 = vrot.slane %v1593, 4
        %v2017 = vrot.slane %v1596, 3
        %v2018 = vsel %vm1798, %v2017, %v2016
        %v2019 = vrot.slane %v1599, 2
        %v2020 = vsel %vm1801, %v2019, %v2018
        %v2021 = vrot.slane %v1602, 1
        %v2022 = vsel %vm1804, %v2021, %v2020
        %v2023 = vsel %vm1807, %v1605, %v2022
        %v2024 = vrot.slane %v1608, 7
        %v2025 = vsel %vm1810, %v2024, %v2023
        %v2026 = vrot.slane %v1611, 6
        %v2027 = vsel %vm1813, %v2026, %v2025
        %v2028 = vrot.slane %v1614, 5
        %v2029 = vsel %vm1816, %v2028, %v2027
        %v2030 = vrot.slane %v1617, 4
        %v2031 = vrot.slane %v1620, 3
        %v2032 = vsel %vm1798, %v2031, %v2030
        %v2033 = vrot.slane %v1623, 2
        %v2034 = vsel %vm1801, %v2033, %v2032
        %v2035 = vrot.slane %v1626, 1
        %v2036 = vsel %vm1804, %v2035, %v2034
        %v2037 = vsel %vm1807, %v1629, %v2036
        %v2038 = vrot.slane %v1632, 7
        %v2039 = vsel %vm1810, %v2038, %v2037
        %v2040 = vrot.slane %v1635, 6
        %v2041 = vsel %vm1813, %v2040, %v2039
        %v2042 = vrot.slane %v1638, 5
        %v2043 = vsel %vm1816, %v2042, %v2041
        %2044 = vrot.lane.b32.xlu0 %v2015, 64
        %v2045 = vpop.permute.xlu0 %2044
        %2046 = vrot.lane.b32.xlu0 %v2029, 64
        %v2047 = vpop.permute.xlu0 %2046
        %2048 = vrot.lane.b32.xlu0 %v2043, 64
        %v2049 = vpop.permute.xlu0 %2048
        %v2053 = vrot.slane %v1569, 5
        %v2054 = vrot.slane %v1572, 4
        %v2055 = vsel %vm1798, %v2054, %v2053
        %v2056 = vrot.slane %v1575, 3
        %v2057 = vsel %vm1801, %v2056, %v2055
        %v2058 = vrot.slane %v1578, 2
        %v2059 = vsel %vm1804, %v2058, %v2057
        %v2060 = vrot.slane %v1581, 1
        %v2061 = vsel %vm1807, %v2060, %v2059
        %v2062 = vsel %vm1810, %v1584, %v2061
        %v2063 = vrot.slane %v1587, 7
        %v2064 = vsel %vm1813, %v2063, %v2062
        %v2065 = vrot.slane %v1590, 6
        %v2066 = vsel %vm1816, %v2065, %v2064
        %v2067 = vrot.slane %v1593, 5
        %v2068 = vrot.slane %v1596, 4
        %v2069 = vsel %vm1798, %v2068, %v2067
        %v2070 = vrot.slane %v1599, 3
        %v2071 = vsel %vm1801, %v2070, %v2069
        %v2072 = vrot.slane %v1602, 2
        %v2073 = vsel %vm1804, %v2072, %v2071
        %v2074 = vrot.slane %v1605, 1
        %v2075 = vsel %vm1807, %v2074, %v2073
        %v2076 = vsel %vm1810, %v1608, %v2075
        %v2077 = vrot.slane %v1611, 7
        %v2078 = vsel %vm1813, %v2077, %v2076
        %v2079 = vrot.slane %v1614, 6
        %v2080 = vsel %vm1816, %v2079, %v2078
        %v2081 = vrot.slane %v1617, 5
        %v2082 = vrot.slane %v1620, 4
        %v2083 = vsel %vm1798, %v2082, %v2081
        %v2084 = vrot.slane %v1623, 3
        %v2085 = vsel %vm1801, %v2084, %v2083
        %v2086 = vrot.slane %v1626, 2
        %v2087 = vsel %vm1804, %v2086, %v2085
        %v2088 = vrot.slane %v1629, 1
        %v2089 = vsel %vm1807, %v2088, %v2087
        %v2090 = vsel %vm1810, %v1632, %v2089
        %v2091 = vrot.slane %v1635, 7
        %v2092 = vsel %vm1813, %v2091, %v2090
        %v2093 = vrot.slane %v1638, 6
        %v2094 = vsel %vm1816, %v2093, %v2092
        %2095 = vrot.lane.b32.xlu0 %v2066, 80
        %v2096 = vpop.permute.xlu0 %2095
        %2097 = vrot.lane.b32.xlu0 %v2080, 80
        %v2098 = vpop.permute.xlu0 %2097
        %2099 = vrot.lane.b32.xlu0 %v2094, 80
        %v2100 = vpop.permute.xlu0 %2099
        %v2104 = vrot.slane %v1569, 6
        %v2105 = vrot.slane %v1572, 5
        %v2106 = vsel %vm1798, %v2105, %v2104
        %v2107 = vrot.slane %v1575, 4
        %v2108 = vsel %vm1801, %v2107, %v2106
        %v2109 = vrot.slane %v1578, 3
        %v2110 = vsel %vm1804, %v2109, %v2108
        %v2111 = vrot.slane %v1581, 2
        %v2112 = vsel %vm1807, %v2111, %v2110
        %v2113 = vrot.slane %v1584, 1
        %v2114 = vsel %vm1810, %v2113, %v2112
        %v2115 = vsel %vm1813, %v1587, %v2114
        %v2116 = vrot.slane %v1590, 7
        %v2117 = vsel %vm1816, %v2116, %v2115
        %v2118 = vrot.slane %v1593, 6
        %v2119 = vrot.slane %v1596, 5
        %v2120 = vsel %vm1798, %v2119, %v2118
        %v2121 = vrot.slane %v1599, 4
        %v2122 = vsel %vm1801, %v2121, %v2120
        %v2123 = vrot.slane %v1602, 3
        %v2124 = vsel %vm1804, %v2123, %v2122
        %v2125 = vrot.slane %v1605, 2
        %v2126 = vsel %vm1807, %v2125, %v2124
        %v2127 = vrot.slane %v1608, 1
        %v2128 = vsel %vm1810, %v2127, %v2126
        %v2129 = vsel %vm1813, %v1611, %v2128
        %v2130 = vrot.slane %v1614, 7
        %v2131 = vsel %vm1816, %v2130, %v2129
        %v2132 = vrot.slane %v1617, 6
        %v2133 = vrot.slane %v1620, 5
        %v2134 = vsel %vm1798, %v2133, %v2132
        %v2135 = vrot.slane %v1623, 4
        %v2136 = vsel %vm1801, %v2135, %v2134
        %v2137 = vrot.slane %v1626, 3
        %v2138 = vsel %vm1804, %v2137, %v2136
        %v2139 = vrot.slane %v1629, 2
        %v2140 = vsel %vm1807, %v2139, %v2138
        %v2141 = vrot.slane %v1632, 1
        %v2142 = vsel %vm1810, %v2141, %v2140
        %v2143 = vsel %vm1813, %v1635, %v2142
        %v2144 = vrot.slane %v1638, 7
        %v2145 = vsel %vm1816, %v2144, %v2143
        %2146 = vrot.lane.b32.xlu0 %v2117, 96
        %v2147 = vpop.permute.xlu0 %2146
        %2148 = vrot.lane.b32.xlu0 %v2131, 96
        %v2149 = vpop.permute.xlu0 %2148
        %2150 = vrot.lane.b32.xlu0 %v2145, 96
        %v2151 = vpop.permute.xlu0 %2150
        %v2155 = vrot.slane %v1569, 7
        %v2156 = vrot.slane %v1572, 6
        %v2157 = vsel %vm1798, %v2156, %v2155
        %v2158 = vrot.slane %v1575, 5
        %v2159 = vsel %vm1801, %v2158, %v2157
        %v2160 = vrot.slane %v1578, 4
        %v2161 = vsel %vm1804, %v2160, %v2159
        %v2162 = vrot.slane %v1581, 3
        %v2163 = vsel %vm1807, %v2162, %v2161
        %v2164 = vrot.slane %v1584, 2
        %v2165 = vsel %vm1810, %v2164, %v2163
        %v2166 = vrot.slane %v1587, 1
        %v2167 = vsel %vm1813, %v2166, %v2165
        %v2168 = vsel %vm1816, %v1590, %v2167
        %v2169 = vrot.slane %v1593, 7
        %v2170 = vrot.slane %v1596, 6
        %v2171 = vsel %vm1798, %v2170, %v2169
        %v2172 = vrot.slane %v1599, 5
        %v2173 = vsel %vm1801, %v2172, %v2171
        %v2174 = vrot.slane %v1602, 4
        %v2175 = vsel %vm1804, %v2174, %v2173
        %v2176 = vrot.slane %v1605, 3
        %v2177 = vsel %vm1807, %v2176, %v2175
        %v2178 = vrot.slane %v1608, 2
        %v2179 = vsel %vm1810, %v2178, %v2177
        %v2180 = vrot.slane %v1611, 1
        %v2181 = vsel %vm1813, %v2180, %v2179
        %v2182 = vsel %vm1816, %v1614, %v2181
        %v2183 = vrot.slane %v1617, 7
        %v2184 = vrot.slane %v1620, 6
        %v2185 = vsel %vm1798, %v2184, %v2183
        %v2186 = vrot.slane %v1623, 5
        %v2187 = vsel %vm1801, %v2186, %v2185
        %v2188 = vrot.slane %v1626, 4
        %v2189 = vsel %vm1804, %v2188, %v2187
        %v2190 = vrot.slane %v1629, 3
        %v2191 = vsel %vm1807, %v2190, %v2189
        %v2192 = vrot.slane %v1632, 2
        %v2193 = vsel %vm1810, %v2192, %v2191
        %v2194 = vrot.slane %v1635, 1
        %v2195 = vsel %vm1813, %v2194, %v2193
        %v2196 = vsel %vm1816, %v1638, %v2195
        %2197 = vrot.lane.b32.xlu0 %v2168, 112
        %v2198 = vpop.permute.xlu0 %2197
        %2199 = vrot.lane.b32.xlu0 %v2182, 112
        %v2200 = vpop.permute.xlu0 %2199
        %2201 = vrot.lane.b32.xlu0 %v2196, 112
        %v2202 = vpop.permute.xlu0 %2201
        %v2206 = vsel %vm1340, %v1817, %v1892
        %v2207 = vsel %vm1340, %v1831, %v1894
        %v2208 = vsel %vm1340, %v1845, %v1896
        %v2209 = vsel %vm1440, %v2206, %v1943
        %v2210 = vsel %vm1440, %v2207, %v1945
        %v2211 = vsel %vm1440, %v2208, %v1947
        %vm2212 = vcmask 392192
        %v2213 = vsel %vm2212, %v2209, %v1994
        %v2214 = vsel %vm2212, %v2210, %v1996
        %v2215 = vsel %vm2212, %v2211, %v1998
        %vm2216 = vcmask 523264
        %v2217 = vsel %vm2216, %v2213, %v2045
        %v2218 = vsel %vm2216, %v2214, %v2047
        %v2219 = vsel %vm2216, %v2215, %v2049
        %vm2220 = vcmask 654336
        %v2221 = vsel %vm2220, %v2217, %v2096
        %v2222 = vsel %vm2220, %v2218, %v2098
        %v2223 = vsel %vm2220, %v2219, %v2100
        %vm2224 = vcmask 785408
        %v2225 = vsel %vm2224, %v2221, %v2147
        %v2226 = vsel %vm2224, %v2222, %v2149
        %v2227 = vsel %vm2224, %v2223, %v2151
        %vm2228 = vcmask 916480
        %v2229 = vsel %vm2228, %v2225, %v2198
        %v2230 = vsel %vm2228, %v2226, %v2200
        %v2231 = vsel %vm2228, %v2227, %v2202
        %2232 = vst [vmem:[%s252] sm:$0xff] %v2229
        %2233 = vst [vmem:[%s252 + $0x8] sm:$0xff] %v2230
        %2234 = vst [vmem:[%s252 + $0x10] sm:$0xff] %v2231
        %s2235 = sand.u32 %s115, 1
        %s2236 = scalar_lea.sflag [#allocation4], %s2235
        %s2237 = sand.u32 %s115, 1
        %s2238 = smul.addr %s2237, 24
        %s2239 = scalar_lea.vmem [#allocation3], %s2238
        %s2240 = sand.u32 %s23, 1
        %s2241 = scalar_lea.sflag [#allocation6], %s2240
        %s2242 = sand.u32 %s143, 1
        %s2243 = scalar_lea.vmem [#allocation5], %s2242
        %s2244 = sand.u32 %s23, 1
        %s2245 = scalar_lea.sflag [#allocation6], %s2244
        %s2246 = sand.u32 %s171, 1
        %s2247 = scalar_lea.vmem [#allocation7], %s2246
        // Predicated region
        $region33: #{tpu_custom_call.1} parent=31 // pred_check
          %p2248 = pneg %p125
        $region34: #{tpu_custom_call.1} parent=31 // pred_check_branch
          %2250 = sbr.rel (%p2248) target = $region36
        $region35: #{tpu_custom_call.1} parent=31 // pred_region
          %s2251 = smul.u32 3, %s28
          %2253 = vsyncadd %s2236, 0
          %s2254 = smul.addr %s27, 3
          %s2255 = sadd.s32 %s2251, %s2254
          %s2256 = smul.addr %s2255, 8
          %s2257 = scalar_lea.hbm %s3, %s2256
          %s2258 = sshll.u32 %s2239, 4
          %s2259 = int_to_ptr.vmem [resolvable:$true] %s2258
          %s2260 = sshll.u32 %s2257, 4
          %s2261 = int_to_ptr.hbm [resolvable:$true] %s2260
          %2266 = dma.vmem_to_hbm [thread:$0]  %s2259, 384, %s2261, %s2236, 128, 128, 8
        $region36: #{tpu_custom_call.1} parent=31 // pred_fallthru
          _
        // Predicated region
        $region37: #{tpu_custom_call.1} parent=31 // pred_check
          %p2267 = pneg %p153
        $region38: #{tpu_custom_call.1} parent=31 // pred_check_branch
          %2269 = sbr.rel (%p2267) target = $region40
        $region39: #{tpu_custom_call.1} parent=31 // pred_region
          %2271 = vsyncadd %s2241, 0
          %s2272 = sadd.s32 %s28, %s27
          %s2273 = scalar_lea.hbm %s4, %s2272
          %s2275 = sshll.u32 %s2243, 4
          %s2276 = int_to_ptr.vmem [resolvable:$true] %s2275
          %s2277 = sshll.u32 %s2273, 4
          %s2278 = int_to_ptr.hbm [resolvable:$true] %s2277
          %2280 = dma.vmem_to_hbm [thread:$0]  %s2276, 16, %s2278, %s2241
        $region40: #{tpu_custom_call.1} parent=31 // pred_fallthru
          _
        // Predicated region
        $region41: #{tpu_custom_call.1} parent=31 // pred_check
          %p2281 = pneg %p181
        $region42: #{tpu_custom_call.1} parent=31 // pred_check_branch
          %2283 = sbr.rel (%p2281) target = $region44
        $region43: #{tpu_custom_call.1} parent=31 // pred_region
          %2285 = vsyncadd %s2245, 0
          %s2286 = sadd.s32 %s28, %s27
          %s2287 = scalar_lea.hbm %s5, %s2286
          %s2289 = sshll.u32 %s2247, 4
          %s2290 = int_to_ptr.vmem [resolvable:$true] %s2289
          %s2291 = sshll.u32 %s2287, 4
          %s2292 = int_to_ptr.hbm [resolvable:$true] %s2291
          %2294 = dma.vmem_to_hbm [thread:$0]  %s2290, 16, %s2292, %s2245
        $region44: #{tpu_custom_call.1} parent=31 // pred_fallthru
          _
      $region32: #{tpu_custom_call.1} parent=5 // pred_fallthru
        _
      %p2295 = scmp.le.s32.totalorder 2, %s18
      // Predicated region
      $region45: #{tpu_custom_call.1} parent=5 // pred_check
        %p2296 = pneg %p2295
      $region46: #{tpu_custom_call.1} parent=5 // pred_check_branch
        %2298 = sbr.rel (%p2296) target = $region48
      $region47: #{tpu_custom_call.1} parent=5 // pred_region
        %s2299 = ssub.s32 %s18, 2
        // Predicated region
        $region49: #{tpu_custom_call.1} parent=47 // pred_check
          %p2300 = pneg %p131
        $region50: #{tpu_custom_call.1} parent=47 // pred_check_branch
          %2302 = sbr.rel (%p2300) target = $region52
        $region51: #{tpu_custom_call.1} parent=47 // pred_region
          %s2303 = sand.u32 %s116, 1
          %s2304 = scalar_lea.sflag [#allocation4], %s2303
          %s2305 = sand.u32 %s116, 1
          %s2306 = smul.addr %s2305, 24
          %s2307 = scalar_lea.vmem [#allocation3], %s2306
          %2309 = dma.done %s2304, 384
        $region52: #{tpu_custom_call.1} parent=47 // pred_fallthru
          _
        // Predicated region
        $region53: #{tpu_custom_call.1} parent=47 // pred_check
          %p2310 = pneg %p159
        $region54: #{tpu_custom_call.1} parent=47 // pred_check_branch
          %2312 = sbr.rel (%p2310) target = $region56
        $region55: #{tpu_custom_call.1} parent=47 // pred_region
          %s2313 = sand.u32 %s24, 1
          %s2314 = scalar_lea.sflag [#allocation6], %s2313
          %s2315 = sand.u32 %s144, 1
          %s2316 = scalar_lea.vmem [#allocation5], %s2315
          %2318 = dma.done %s2314, 16
        $region56: #{tpu_custom_call.1} parent=47 // pred_fallthru
          _
        // Predicated region
        $region57: #{tpu_custom_call.1} parent=47 // pred_check
          %p2319 = pneg %p187
        $region58: #{tpu_custom_call.1} parent=47 // pred_check_branch
          %2321 = sbr.rel (%p2319) target = $region60
        $region59: #{tpu_custom_call.1} parent=47 // pred_region
          %s2322 = sand.u32 %s24, 1
          %s2323 = scalar_lea.sflag [#allocation6], %s2322
          %s2324 = sand.u32 %s172, 1
          %s2325 = scalar_lea.vmem [#allocation7], %s2324
          %2327 = dma.done %s2323, 16
        $region60: #{tpu_custom_call.1} parent=47 // pred_fallthru
          _
      $region48: #{tpu_custom_call.1} parent=5 // pred_fallthru
        _
    $region6: #{tpu_custom_call.1} parent=1 // loop_footer
      %s22 = sadd.s32 1, %s18
    $region7: #{tpu_custom_call.1} parent=1 // loop_footer_branch
      %17 = sbr.rel target = $region3
    $region8: #{tpu_custom_call.1} parent=1 // loop_exit
      _
    %2328 = vsyncpa [#allocation4], 1
    %s2329 = scalar_lea.sflag [#allocation4], 1
    %2330 = vsyncpa %s2329, 1
    %2331 = vsyncpa [#allocation6], 1
    %s2332 = scalar_lea.sflag [#allocation6], 1
    %2333 = vsyncpa %s2332, 1

</llo_original>
